<compile_context>
chip_gen: v7x
topology: tpu7x:2x2x1
jax: 0.10.0
libtpu: 0.0.40
codegen_flags: <defaults>
</compile_context>

<pallas_src>
import functools

import jax
import jax.numpy as jnp
from jax.experimental import pallas as pl
from jax.experimental.pallas import tpu as pltpu


def simsiam_kernel(x_ref,
                   w_enc_ref, b_enc_ref,
                   w_p1_ref, b_p1_ref,
                   w_p2_ref, b_p2_ref,
                   w_q1_ref, bn_g_ref, bn_b_ref,
                   w_q2_ref, b_q2_ref,
                   p_ref, t_ref,
                   *, batch: int, m_half: int):
    """Both views stacked on M: rows [0, m_half) = view 1, [m_half, 2*m_half) = view 2.

    Rows >= `batch` within each view are zero padding; they ride along through the
    row-wise matmuls but are excluded from the per-view BatchNorm statistics and
    sliced off in the wrapper."""
    x = x_ref[...]                                            # [M, d_in] bf16

    # ---- stand-in encoder: Linear + ReLU (bf16 MXU, f32 accumulate) ----
    h = jnp.dot(x, w_enc_ref[...], preferred_element_type=jnp.float32) + b_enc_ref[...]
    h = jnp.maximum(h, 0.0).astype(jnp.bfloat16)

    # ---- projector = MLPHead(n_layers=2, use_bn=False): Linear -> ReLU -> Linear ----
    h = jnp.dot(h, w_p1_ref[...], preferred_element_type=jnp.float32) + b_p1_ref[...]
    h = jnp.maximum(h, 0.0).astype(jnp.bfloat16)
    t = jnp.dot(h, w_p2_ref[...], preferred_element_type=jnp.float32) + b_p2_ref[...]
    t_ref[...] = t

    # ---- predictor: Linear(bias=False) -> BatchNorm1d(train) -> ReLU -> Linear ----
    h = jnp.dot(t.astype(jnp.bfloat16), w_q1_ref[...],
                preferred_element_type=jnp.float32)           # [M, F] f32

    gamma = bn_g_ref[...]
    beta = bn_b_ref[...]
    inv_n = 1.0 / float(batch)

    def bn_scale_shift(hv):
        # Single-pass E[x^2]-mu^2 variance in f32 (clamped at 0); adequate for
        # normalized activations / small batches.  Biased (1/N) variance and
        # eps=1e-5 match PyTorch BatchNorm1d training-mode normalization.
        if batch == m_half:
            mu = jnp.sum(hv, axis=0, keepdims=True) * inv_n
            var = jnp.sum(hv * hv, axis=0, keepdims=True) * inv_n - mu * mu
        else:
            row = jax.lax.broadcasted_iota(jnp.int32, hv.shape, 0)
            hm = jnp.where(row < batch, hv, 0.0)
            mu = jnp.sum(hm, axis=0, keepdims=True) * inv_n
            var = jnp.sum(hm * hm, axis=0, keepdims=True) * inv_n - mu * mu
        scale = gamma * jax.lax.rsqrt(jnp.maximum(var, 0.0) + 1e-5)
        shift = beta - mu * scale
        return scale, shift

    # Per-view statistics: PyTorch runs the predictor on each view separately,
    # so BN stats must not mix the two views.  Slices are sublane(8)-aligned.
    s1, sh1 = bn_scale_shift(h[:m_half])
    s2, sh2 = bn_scale_shift(h[m_half:])
    row = jax.lax.broadcasted_iota(jnp.int32, h.shape, 0)
    in_view1 = row < m_half
    scale = jnp.where(in_view1, s1, s2)
    shift = jnp.where(in_view1, sh1, sh2)
    h = jnp.maximum(h * scale + shift, 0.0)

    p_ref[...] = jnp.dot(h.astype(jnp.bfloat16), w_q2_ref[...],
                         preferred_element_type=jnp.float32) + b_q2_ref[...]


def _round_up(n: int, m: int) -> int:
    return ((n + m - 1) // m) * m


def simsiam_forward(x1, x2, params):
    """x1, x2: [B, C, H, W] float32. Returns (p1, p2, t1_detached, t2_detached)."""
    B = x1.shape[0]
    # Row-major flatten (matches torch .view(B, -1)); ship bf16 to the kernel
    # so the largest input DMA moves half the bytes.
    x1f = x1.reshape(B, -1).astype(jnp.bfloat16)
    x2f = x2.reshape(B, -1).astype(jnp.bfloat16)
    d_in = x1f.shape[1]

    (w_enc, b_enc, w_p1, b_p1, w_p2, b_p2,
     w_q1, bn_g, bn_b, w_q2, b_q2) = params
    feature_dim = w_p2.shape[1]
    predict_dim = w_q2.shape[1]

    # Pad each view to a sublane multiple (8); stacked M = 2*m_half is then a
    # multiple of 16, so bf16 activation vregs pack densely.
    m_half = max(8, _round_up(B, 8))
    if m_half != B:
        pad = ((0, m_half - B), (0, 0))
        x1f = jnp.pad(x1f, pad)
        x2f = jnp.pad(x2f, pad)
    x = jnp.concatenate([x1f, x2f], axis=0)                   # [2*m_half, d_in] bf16
    m_total = 2 * m_half

    def whole(arr):
        # Whole array resident in VMEM; single grid step -> DMA'd exactly once.
        return pl.BlockSpec(arr.shape, lambda i, _n=arr.ndim: (0,) * _n)

    weights = (w_enc, b_enc, w_p1, b_p1, w_p2, b_p2,
               w_q1, bn_g, bn_b, w_q2, b_q2)

    kernel = functools.partial(simsiam_kernel, batch=B, m_half=m_half)

    p, t = pl.pallas_call(
        kernel,
        grid=(1,),  # both views fused into a single step (shared matmuls)
        out_shape=(
            jax.ShapeDtypeStruct((m_total, predict_dim), jnp.float32),
            jax.ShapeDtypeStruct((m_total, feature_dim), jnp.float32),
        ),
        in_specs=[whole(x)] + [whole(a) for a in weights],
        out_specs=(
            pl.BlockSpec((m_total, predict_dim), lambda i: (0, 0)),
            pl.BlockSpec((m_total, feature_dim), lambda i: (0, 0)),
        ),
        compiler_params=pltpu.CompilerParams(
            dimension_semantics=("arbitrary",),
            vmem_limit_bytes=16 * 1024 * 1024,  # real footprint ~2 MiB; leave headroom
        ),
    )(x, *weights)

    p1, p2 = p[:B], p[m_half:m_half + B]
    t1, t2 = t[:B], t[m_half:m_half + B]
    # .detach() is a no-op for forward values; mirror it with stop_gradient.
    return p1, p2, jax.lax.stop_gradient(t1), jax.lax.stop_gradient(t2)


def init_params(key, d_in, encoder_dim, hidden_dim, feature_dim, predict_dim):
    ks = jax.random.split(key, 5)

    def lin_w(k, i, o):
        # bf16 weights: halves HBM/VMEM traffic, native MXU dtype on v6e/v7x.
        return (jax.random.normal(k, (i, o), jnp.float32) * (1.0 / jnp.sqrt(i))
                ).astype(jnp.bfloat16)

    w_enc = lin_w(ks[0], d_in, encoder_dim)
    b_enc = jnp.zeros((1, encoder_dim), jnp.float32)
    # projector: Linear(encoder_dim, hidden_dim) -> ReLU -> Linear(hidden_dim, feature_dim)
    w_p1 = lin_w(ks[1], encoder_dim, hidden_dim)
    b_p1 = jnp.zeros((1, hidden_dim), jnp.float32)
    w_p2 = lin_w(ks[2], hidden_dim, feature_dim)
    b_p2 = jnp.zeros((1, feature_dim), jnp.float32)
    # predictor: Linear(feature_dim, feature_dim, bias=False) -> BN -> ReLU -> Linear
    w_q1 = lin_w(ks[3], feature_dim, feature_dim)
    bn_g = jnp.ones((1, feature_dim), jnp.float32)   # BatchNorm1d default gamma
    bn_b = jnp.zeros((1, feature_dim), jnp.float32)  # BatchNorm1d default beta
    w_q2 = lin_w(ks[4], feature_dim, predict_dim)
    b_q2 = jnp.zeros((1, predict_dim), jnp.float32)
    return (w_enc, b_enc, w_p1, b_p1, w_p2, b_p2, w_q1, bn_g, bn_b, w_q2, b_q2)


if __name__ == "__main__":
    key = jax.random.PRNGKey(0)
    B, C, H, W = 2, 4, 16, 16
    d_in = C * H * W                      # 1024 (128-aligned)
    # 128-aligned (lane-dense) small dims so every output store is unmasked.
    encoder_dim, hidden_dim, feature_dim, predict_dim = 256, 256, 256, 128

    k_param, k_x1, k_x2 = jax.random.split(key, 3)
    params = init_params(k_param, d_in, encoder_dim, hidden_dim, feature_dim, predict_dim)

    x1 = jax.random.normal(k_x1, (B, C, H, W), jnp.float32)
    x2 = jax.random.normal(k_x2, (B, C, H, W), jnp.float32)

    p1, p2, t1, t2 = jax.jit(simsiam_forward)(x1, x2, params)
    jax.block_until_ready((p1, p2, t1, t2))

    assert p1.shape == (B, predict_dim) and p2.shape == (B, predict_dim)
    assert t1.shape == (B, feature_dim) and t2.shape == (B, feature_dim)
    assert bool(jnp.all(jnp.isfinite(p1))) and bool(jnp.all(jnp.isfinite(t1)))
    print("KERNEL_OK")
</pallas_src>

<mosaic_0001>
module attributes {stable_mosaic.version = 11 : i64} {
  func.func @simsiam_kernel(%arg0: i32, %arg1: memref<16x1024xbf16, #tpu.memory_space<vmem>>, %arg2: memref<1024x256xbf16, #tpu.memory_space<vmem>>, %arg3: memref<1x256xf32, #tpu.memory_space<vmem>>, %arg4: memref<256x256xbf16, #tpu.memory_space<vmem>>, %arg5: memref<1x256xf32, #tpu.memory_space<vmem>>, %arg6: memref<256x256xbf16, #tpu.memory_space<vmem>>, %arg7: memref<1x256xf32, #tpu.memory_space<vmem>>, %arg8: memref<256x256xbf16, #tpu.memory_space<vmem>>, %arg9: memref<1x256xf32, #tpu.memory_space<vmem>>, %arg10: memref<1x256xf32, #tpu.memory_space<vmem>>, %arg11: memref<256x128xbf16, #tpu.memory_space<vmem>>, %arg12: memref<1x128xf32, #tpu.memory_space<vmem>>, %arg13: memref<16x128xf32, #tpu.memory_space<vmem>>, %arg14: memref<16x256xf32, #tpu.memory_space<vmem>>) attributes {dimension_semantics = [#tpu.dimension_semantics<arbitrary>], iteration_bounds = array<i64: 1>, scalar_prefetch = 0 : i64, scratch_operands = 0 : i64, tpu.core_type = #tpu.core_type<tc>, window_params = [{pipeline_mode = #tpu.pipeline_mode<synchronous>, transform_indices = @transform_0, window_bounds = array<i64: 16, 1024>}, {pipeline_mode = #tpu.pipeline_mode<synchronous>, transform_indices = @transform_1, window_bounds = array<i64: 1024, 256>}, {pipeline_mode = #tpu.pipeline_mode<synchronous>, transform_indices = @transform_2, window_bounds = array<i64: 1, 256>}, {pipeline_mode = #tpu.pipeline_mode<synchronous>, transform_indices = @transform_3, window_bounds = array<i64: 256, 256>}, {pipeline_mode = #tpu.pipeline_mode<synchronous>, transform_indices = @transform_4, window_bounds = array<i64: 1, 256>}, {pipeline_mode = #tpu.pipeline_mode<synchronous>, transform_indices = @transform_5, window_bounds = array<i64: 256, 256>}, {pipeline_mode = #tpu.pipeline_mode<synchronous>, transform_indices = @transform_6, window_bounds = array<i64: 1, 256>}, {pipeline_mode = #tpu.pipeline_mode<synchronous>, transform_indices = @transform_7, window_bounds = array<i64: 256, 256>}, {pipeline_mode = #tpu.pipeline_mode<synchronous>, transform_indices = @transform_8, window_bounds = array<i64: 1, 256>}, {pipeline_mode = #tpu.pipeline_mode<synchronous>, transform_indices = @transform_9, window_bounds = array<i64: 1, 256>}, {pipeline_mode = #tpu.pipeline_mode<synchronous>, transform_indices = @transform_10, window_bounds = array<i64: 256, 128>}, {pipeline_mode = #tpu.pipeline_mode<synchronous>, transform_indices = @transform_11, window_bounds = array<i64: 1, 128>}, {pipeline_mode = #tpu.pipeline_mode<synchronous>, transform_indices = @transform_12, window_bounds = array<i64: 16, 128>}, {pipeline_mode = #tpu.pipeline_mode<synchronous>, transform_indices = @transform_13, window_bounds = array<i64: 16, 256>}]} {
    %c0 = arith.constant 0 : index
    %c0_0 = arith.constant 0 : index
    %0 = vector.load %arg1[%c0, %c0_0] : memref<16x1024xbf16, #tpu.memory_space<vmem>>, vector<16x1024xbf16>
    %c0_1 = arith.constant 0 : index
    %c0_2 = arith.constant 0 : index
    %1 = vector.load %arg2[%c0_1, %c0_2] : memref<1024x256xbf16, #tpu.memory_space<vmem>>, vector<1024x256xbf16>
    %cst = arith.constant dense<0.000000e+00> : vector<16x256xf32>
    %2 = tpu.matmul %0, %1, %cst {dimension_numbers = #tpu.dot_dimension_numbers<[1], [0], [0], [1], [0, 0, 1, 1], [], []>} : vector<16x1024xbf16>, vector<1024x256xbf16>, vector<16x256xf32> -> vector<16x256xf32>
    %c0_3 = arith.constant 0 : index
    %c0_4 = arith.constant 0 : index
    %3 = vector.load %arg3[%c0_3, %c0_4] : memref<1x256xf32, #tpu.memory_space<vmem>>, vector<1x256xf32>
    %4 = vector.broadcast %3 : vector<1x256xf32> to vector<16x256xf32>
    %5 = arith.addf %2, %4 : vector<16x256xf32>
    %cst_5 = arith.constant 0.000000e+00 : f32
    %6 = vector.broadcast %cst_5 : f32 to vector<16x256xf32>
    %7 = arith.maximumf %5, %6 : vector<16x256xf32>
    %8 = arith.truncf %7 : vector<16x256xf32> to vector<16x256xbf16>
    %c0_6 = arith.constant 0 : index
    %c0_7 = arith.constant 0 : index
    %9 = vector.load %arg4[%c0_6, %c0_7] : memref<256x256xbf16, #tpu.memory_space<vmem>>, vector<256x256xbf16>
    %cst_8 = arith.constant dense<0.000000e+00> : vector<16x256xf32>
    %10 = tpu.matmul %8, %9, %cst_8 {dimension_numbers = #tpu.dot_dimension_numbers<[1], [0], [0], [1], [0, 0, 1, 1], [], []>} : vector<16x256xbf16>, vector<256x256xbf16>, vector<16x256xf32> -> vector<16x256xf32>
    %c0_9 = arith.constant 0 : index
    %c0_10 = arith.constant 0 : index
    %11 = vector.load %arg5[%c0_9, %c0_10] : memref<1x256xf32, #tpu.memory_space<vmem>>, vector<1x256xf32>
    %12 = vector.broadcast %11 : vector<1x256xf32> to vector<16x256xf32>
    %13 = arith.addf %10, %12 : vector<16x256xf32>
    %cst_11 = arith.constant 0.000000e+00 : f32
    %14 = vector.broadcast %cst_11 : f32 to vector<16x256xf32>
    %15 = arith.maximumf %13, %14 : vector<16x256xf32>
    %16 = arith.truncf %15 : vector<16x256xf32> to vector<16x256xbf16>
    %c0_12 = arith.constant 0 : index
    %c0_13 = arith.constant 0 : index
    %17 = vector.load %arg6[%c0_12, %c0_13] : memref<256x256xbf16, #tpu.memory_space<vmem>>, vector<256x256xbf16>
    %cst_14 = arith.constant dense<0.000000e+00> : vector<16x256xf32>
    %18 = tpu.matmul %16, %17, %cst_14 {dimension_numbers = #tpu.dot_dimension_numbers<[1], [0], [0], [1], [0, 0, 1, 1], [], []>} : vector<16x256xbf16>, vector<256x256xbf16>, vector<16x256xf32> -> vector<16x256xf32>
    %c0_15 = arith.constant 0 : index
    %c0_16 = arith.constant 0 : index
    %19 = vector.load %arg7[%c0_15, %c0_16] : memref<1x256xf32, #tpu.memory_space<vmem>>, vector<1x256xf32>
    %20 = vector.broadcast %19 : vector<1x256xf32> to vector<16x256xf32>
    %21 = arith.addf %18, %20 : vector<16x256xf32>
    %c0_17 = arith.constant 0 : index
    %c0_18 = arith.constant 0 : index
    %22 = vector.load %arg14[%c0_17, %c0_18] : memref<16x256xf32, #tpu.memory_space<vmem>>, vector<16x256xf32>
    tpu.vector_store %arg14[%c0_17, %c0_18], %21 {strides = array<i32>} : memref<16x256xf32, #tpu.memory_space<vmem>>, vector<16x256xf32>,
    %23 = arith.truncf %21 : vector<16x256xf32> to vector<16x256xbf16>
    %c0_19 = arith.constant 0 : index
    %c0_20 = arith.constant 0 : index
    %24 = vector.load %arg8[%c0_19, %c0_20] : memref<256x256xbf16, #tpu.memory_space<vmem>>, vector<256x256xbf16>
    %cst_21 = arith.constant dense<0.000000e+00> : vector<16x256xf32>
    %25 = tpu.matmul %23, %24, %cst_21 {dimension_numbers = #tpu.dot_dimension_numbers<[1], [0], [0], [1], [0, 0, 1, 1], [], []>} : vector<16x256xbf16>, vector<256x256xbf16>, vector<16x256xf32> -> vector<16x256xf32>
    %c0_22 = arith.constant 0 : index
    %c0_23 = arith.constant 0 : index
    %26 = vector.load %arg9[%c0_22, %c0_23] : memref<1x256xf32, #tpu.memory_space<vmem>>, vector<1x256xf32>
    %c0_24 = arith.constant 0 : index
    %c0_25 = arith.constant 0 : index
    %27 = vector.load %arg10[%c0_24, %c0_25] : memref<1x256xf32, #tpu.memory_space<vmem>>, vector<1x256xf32>
    %28 = vector.extract_strided_slice %25 {offsets = [0, 0], sizes = [8, 256], strides = [1, 1]} : vector<16x256xf32> to vector<8x256xf32>
    %29 = tpu.iota {dimensions = array<i32: 0>} : vector<8x256xi32>
    %c2_i32 = arith.constant 2 : i32
    %30 = vector.broadcast %c2_i32 : i32 to vector<8x256xi32>
    %31 = arith.cmpi slt, %29, %30 : vector<8x256xi32>
    %cst_26 = arith.constant 0.000000e+00 : f32
    %32 = vector.broadcast %cst_26 : f32 to vector<8x256xf32>
    %33 = arith.select %31, %28, %32 : vector<8x256xi1>, vector<8x256xf32>
    %cst_27 = arith.constant dense<0.000000e+00> : vector<256xf32>
    %34 = vector.multi_reduction <add>, %33, %cst_27 [0] : vector<8x256xf32> to vector<256xf32>
    %35 = vector.shape_cast %34 : vector<256xf32> to vector<1x256xf32>
    %cst_28 = arith.constant 5.000000e-01 : f32
    %36 = vector.broadcast %cst_28 : f32 to vector<1x256xf32>
    %37 = arith.mulf %35, %36 : vector<1x256xf32>
    %38 = arith.mulf %33, %33 : vector<8x256xf32>
    %cst_29 = arith.constant dense<0.000000e+00> : vector<256xf32>
    %39 = vector.multi_reduction <add>, %38, %cst_29 [0] : vector<8x256xf32> to vector<256xf32>
    %40 = vector.shape_cast %39 : vector<256xf32> to vector<1x256xf32>
    %cst_30 = arith.constant 5.000000e-01 : f32
    %41 = vector.broadcast %cst_30 : f32 to vector<1x256xf32>
    %42 = arith.mulf %40, %41 : vector<1x256xf32>
    %43 = arith.mulf %37, %37 : vector<1x256xf32>
    %44 = arith.subf %42, %43 : vector<1x256xf32>
    %cst_31 = arith.constant 0.000000e+00 : f32
    %45 = vector.broadcast %cst_31 : f32 to vector<1x256xf32>
    %46 = arith.maximumf %44, %45 : vector<1x256xf32>
    %cst_32 = arith.constant 9.99999974E-6 : f32
    %47 = vector.broadcast %cst_32 : f32 to vector<1x256xf32>
    %48 = arith.addf %46, %47 : vector<1x256xf32>
    %49 = math.rsqrt %48 : vector<1x256xf32>
    %50 = arith.mulf %26, %49 : vector<1x256xf32>
    %51 = arith.mulf %37, %50 : vector<1x256xf32>
    %52 = arith.subf %27, %51 : vector<1x256xf32>
    %53 = vector.extract_strided_slice %25 {offsets = [8, 0], sizes = [8, 256], strides = [1, 1]} : vector<16x256xf32> to vector<8x256xf32>
    %54 = tpu.iota {dimensions = array<i32: 0>} : vector<8x256xi32>
    %c2_i32_33 = arith.constant 2 : i32
    %55 = vector.broadcast %c2_i32_33 : i32 to vector<8x256xi32>
    %56 = arith.cmpi slt, %54, %55 : vector<8x256xi32>
    %cst_34 = arith.constant 0.000000e+00 : f32
    %57 = vector.broadcast %cst_34 : f32 to vector<8x256xf32>
    %58 = arith.select %56, %53, %57 : vector<8x256xi1>, vector<8x256xf32>
    %cst_35 = arith.constant dense<0.000000e+00> : vector<256xf32>
    %59 = vector.multi_reduction <add>, %58, %cst_35 [0] : vector<8x256xf32> to vector<256xf32>
    %60 = vector.shape_cast %59 : vector<256xf32> to vector<1x256xf32>
    %cst_36 = arith.constant 5.000000e-01 : f32
    %61 = vector.broadcast %cst_36 : f32 to vector<1x256xf32>
    %62 = arith.mulf %60, %61 : vector<1x256xf32>
    %63 = arith.mulf %58, %58 : vector<8x256xf32>
    %cst_37 = arith.constant dense<0.000000e+00> : vector<256xf32>
    %64 = vector.multi_reduction <add>, %63, %cst_37 [0] : vector<8x256xf32> to vector<256xf32>
    %65 = vector.shape_cast %64 : vector<256xf32> to vector<1x256xf32>
    %cst_38 = arith.constant 5.000000e-01 : f32
    %66 = vector.broadcast %cst_38 : f32 to vector<1x256xf32>
    %67 = arith.mulf %65, %66 : vector<1x256xf32>
    %68 = arith.mulf %62, %62 : vector<1x256xf32>
    %69 = arith.subf %67, %68 : vector<1x256xf32>
    %cst_39 = arith.constant 0.000000e+00 : f32
    %70 = vector.broadcast %cst_39 : f32 to vector<1x256xf32>
    %71 = arith.maximumf %69, %70 : vector<1x256xf32>
    %cst_40 = arith.constant 9.99999974E-6 : f32
    %72 = vector.broadcast %cst_40 : f32 to vector<1x256xf32>
    %73 = arith.addf %71, %72 : vector<1x256xf32>
    %74 = math.rsqrt %73 : vector<1x256xf32>
    %75 = arith.mulf %26, %74 : vector<1x256xf32>
    %76 = arith.mulf %62, %75 : vector<1x256xf32>
    %77 = arith.subf %27, %76 : vector<1x256xf32>
    %78 = tpu.iota {dimensions = array<i32: 0>} : vector<16x256xi32>
    %c8_i32 = arith.constant 8 : i32
    %79 = vector.broadcast %c8_i32 : i32 to vector<16x256xi32>
    %80 = arith.cmpi slt, %78, %79 : vector<16x256xi32>
    %81 = vector.shape_cast %50 : vector<1x256xf32> to vector<1x256xf32>
    %82 = vector.broadcast %81 : vector<1x256xf32> to vector<16x256xf32>
    %83 = vector.shape_cast %75 : vector<1x256xf32> to vector<1x256xf32>
    %84 = vector.broadcast %83 : vector<1x256xf32> to vector<16x256xf32>
    %85 = arith.select %80, %82, %84 : vector<16x256xi1>, vector<16x256xf32>
    %86 = vector.shape_cast %52 : vector<1x256xf32> to vector<1x256xf32>
    %87 = vector.broadcast %86 : vector<1x256xf32> to vector<16x256xf32>
    %88 = vector.shape_cast %77 : vector<1x256xf32> to vector<1x256xf32>
    %89 = vector.broadcast %88 : vector<1x256xf32> to vector<16x256xf32>
    %90 = arith.select %80, %87, %89 : vector<16x256xi1>, vector<16x256xf32>
    %91 = arith.mulf %25, %85 : vector<16x256xf32>
    %92 = arith.addf %91, %90 : vector<16x256xf32>
    %cst_41 = arith.constant 0.000000e+00 : f32
    %93 = vector.broadcast %cst_41 : f32 to vector<16x256xf32>
    %94 = arith.maximumf %92, %93 : vector<16x256xf32>
    %95 = arith.truncf %94 : vector<16x256xf32> to vector<16x256xbf16>
    %c0_42 = arith.constant 0 : index
    %c0_43 = arith.constant 0 : index
    %96 = vector.load %arg11[%c0_42, %c0_43] : memref<256x128xbf16, #tpu.memory_space<vmem>>, vector<256x128xbf16>
    %cst_44 = arith.constant dense<0.000000e+00> : vector<16x128xf32>
    %97 = tpu.matmul %95, %96, %cst_44 {dimension_numbers = #tpu.dot_dimension_numbers<[1], [0], [0], [1], [0, 0, 1, 1], [], []>} : vector<16x256xbf16>, vector<256x128xbf16>, vector<16x128xf32> -> vector<16x128xf32>
    %c0_45 = arith.constant 0 : index
    %c0_46 = arith.constant 0 : index
    %98 = vector.load %arg12[%c0_45, %c0_46] : memref<1x128xf32, #tpu.memory_space<vmem>>, vector<1x128xf32>
    %99 = vector.broadcast %98 : vector<1x128xf32> to vector<16x128xf32>
    %100 = arith.addf %97, %99 : vector<16x128xf32>
    %c0_47 = arith.constant 0 : index
    %c0_48 = arith.constant 0 : index
    %101 = vector.load %arg13[%c0_47, %c0_48] : memref<16x128xf32, #tpu.memory_space<vmem>>, vector<16x128xf32>
    tpu.vector_store %arg13[%c0_47, %c0_48], %100 {strides = array<i32>} : memref<16x128xf32, #tpu.memory_space<vmem>>, vector<16x128xf32>,
    return
  }
  func.func @transform_0(%arg0: i32) -> (i32, i32) {
    %c0_i32 = arith.constant 0 : i32
    %c0_i32_0 = arith.constant 0 : i32
    %c0_i32_1 = arith.constant 0 : i32
    return %c0_i32, %c0_i32_0 : i32, i32
  }
  func.func @transform_1(%arg0: i32) -> (i32, i32) {
    %c0_i32 = arith.constant 0 : i32
    %c0_i32_0 = arith.constant 0 : i32
    %c0_i32_1 = arith.constant 0 : i32
    return %c0_i32, %c0_i32_0 : i32, i32
  }
  func.func @transform_2(%arg0: i32) -> (i32, i32) {
    %c0_i32 = arith.constant 0 : i32
    %c0_i32_0 = arith.constant 0 : i32
    %c0_i32_1 = arith.constant 0 : i32
    return %c0_i32, %c0_i32_0 : i32, i32
  }
  func.func @transform_3(%arg0: i32) -> (i32, i32) {
    %c0_i32 = arith.constant 0 : i32
    %c0_i32_0 = arith.constant 0 : i32
    %c0_i32_1 = arith.constant 0 : i32
    return %c0_i32, %c0_i32_0 : i32, i32
  }
  func.func @transform_4(%arg0: i32) -> (i32, i32) {
    %c0_i32 = arith.constant 0 : i32
    %c0_i32_0 = arith.constant 0 : i32
    %c0_i32_1 = arith.constant 0 : i32
    return %c0_i32, %c0_i32_0 : i32, i32
  }
  func.func @transform_5(%arg0: i32) -> (i32, i32) {
    %c0_i32 = arith.constant 0 : i32
    %c0_i32_0 = arith.constant 0 : i32
    %c0_i32_1 = arith.constant 0 : i32
    return %c0_i32, %c0_i32_0 : i32, i32
  }
  func.func @transform_6(%arg0: i32) -> (i32, i32) {
    %c0_i32 = arith.constant 0 : i32
    %c0_i32_0 = arith.constant 0 : i32
    %c0_i32_1 = arith.constant 0 : i32
    return %c0_i32, %c0_i32_0 : i32, i32
  }
  func.func @transform_7(%arg0: i32) -> (i32, i32) {
    %c0_i32 = arith.constant 0 : i32
    %c0_i32_0 = arith.constant 0 : i32
    %c0_i32_1 = arith.constant 0 : i32
    return %c0_i32, %c0_i32_0 : i32, i32
  }
  func.func @transform_8(%arg0: i32) -> (i32, i32) {
    %c0_i32 = arith.constant 0 : i32
    %c0_i32_0 = arith.constant 0 : i32
    %c0_i32_1 = arith.constant 0 : i32
    return %c0_i32, %c0_i32_0 : i32, i32
  }
  func.func @transform_9(%arg0: i32) -> (i32, i32) {
    %c0_i32 = arith.constant 0 : i32
    %c0_i32_0 = arith.constant 0 : i32
    %c0_i32_1 = arith.constant 0 : i32
    return %c0_i32, %c0_i32_0 : i32, i32
  }
  func.func @transform_10(%arg0: i32) -> (i32, i32) {
    %c0_i32 = arith.constant 0 : i32
    %c0_i32_0 = arith.constant 0 : i32
    %c0_i32_1 = arith.constant 0 : i32
    return %c0_i32, %c0_i32_0 : i32, i32
  }
  func.func @transform_11(%arg0: i32) -> (i32, i32) {
    %c0_i32 = arith.constant 0 : i32
    %c0_i32_0 = arith.constant 0 : i32
    %c0_i32_1 = arith.constant 0 : i32
    return %c0_i32, %c0_i32_0 : i32, i32
  }
  func.func @transform_12(%arg0: i32) -> (i32, i32) {
    %c0_i32 = arith.constant 0 : i32
    %c0_i32_0 = arith.constant 0 : i32
    %c0_i32_1 = arith.constant 0 : i32
    return %c0_i32, %c0_i32_0 : i32, i32
  }
  func.func @transform_13(%arg0: i32) -> (i32, i32) {
    %c0_i32 = arith.constant 0 : i32
    %c0_i32_0 = arith.constant 0 : i32
    %c0_i32_1 = arith.constant 0 : i32
    return %c0_i32, %c0_i32_0 : i32, i32
  }
}

</mosaic_0001>

<llo_original>
// kernel: simsiam_forward.1
$region0: #{simsiam_forward.1}
  #allocation0 [shape = 'u32[]', space=smem, size = 0x4, offset = 0x4, fixed_abs, tag = 'smem constant byte address 0x4 - core index']
  #allocation1 [shape = 'u32[144,128]{1,0:T(1,128)}', space=vmem, size = 0x12000, scoped, tag = 'internal scratch']
  %s0 = inlined_call_operand.vmem [shape: bf16[16,1024], index: 0, kind: input, shape index: {}]
  %s1 = inlined_call_operand.hbm [shape: bf16[1024,256], index: 1, kind: input, shape index: {}]
  %s2 = inlined_call_operand.vmem [shape: f32[1,256], index: 2, kind: input, shape index: {}]
  %s3 = inlined_call_operand.vmem [shape: bf16[256,256], index: 3, kind: input, shape index: {}]
  %s4 = inlined_call_operand.vmem [shape: f32[1,256], index: 4, kind: input, shape index: {}]
  %s5 = inlined_call_operand.vmem [shape: bf16[256,256], index: 5, kind: input, shape index: {}]
  %s6 = inlined_call_operand.hbm [shape: f32[1,256], index: 6, kind: input, shape index: {}]
  %s7 = inlined_call_operand.hbm [shape: bf16[256,256], index: 7, kind: input, shape index: {}]
  %s8 = inlined_call_operand.hbm [shape: f32[1,256], index: 8, kind: input, shape index: {}]
  %s9 = inlined_call_operand.hbm [shape: f32[1,256], index: 9, kind: input, shape index: {}]
  %s10 = inlined_call_operand.vmem [shape: bf16[256,128], index: 10, kind: input, shape index: {}]
  %s11 = inlined_call_operand.vmem [shape: f32[1,128], index: 11, kind: input, shape index: {}]
  %s12 = inlined_call_operand.vmem [shape: f32[16,128], index: 12, kind: output, shape index: {0}]
  %s13 = inlined_call_operand.vmem [shape: f32[16,256], index: 13, kind: output, shape index: {1}]
  %14 = xla_tuple %s12, %s13
  %s15 = sld [smem:[#allocation0]]
  $region86: #{simsiam_forward.1} parent=0
    _
  %s17 = ssub.s32 1, %s15
  %s18 = scalar_select 0, %s17, %s15
  $region1: #{simsiam_forward.1} parent=0
    #allocation2 [shape = 'u8[524288]{0}', space=vmem, size = 0x80000, scoped, tag = 'input window, operand 1, single buffered']
    #allocation3 [shape = 's32[1]{0}', space=sflag, size = 0x4, scoped, tag = 'scoped memory for simsiam_forward.1']
    #allocation4 [shape = 'u8[1024]{0}', space=vmem, size = 0x400, scoped, tag = 'input window, operand 6, single buffered']
    #allocation5 [shape = 's32[1]{0}', space=sflag, size = 0x4, scoped, tag = 'scoped memory for simsiam_forward.1']
    #allocation6 [shape = 'u8[131072]{0}', space=vmem, size = 0x20000, scoped, tag = 'input window, operand 7, single buffered']
    #allocation7 [shape = 'u8[1024]{0}', space=vmem, size = 0x400, scoped, tag = 'input window, operand 8, single buffered']
    #allocation8 [shape = 's32[1]{0}', space=sflag, size = 0x4, scoped, tag = 'scoped memory for simsiam_forward.1']
    #allocation9 [shape = 'u8[1024]{0}', space=vmem, size = 0x400, scoped, tag = 'input window, operand 9, single buffered']
    %19 = vsyncpa [#allocation3], 0
    %20 = vsyncpa [#allocation5], 0
    %21 = vsyncpa [#allocation8], 0
    // Predicated region
    $region2: #{simsiam_forward.1} parent=1 // pred_check
      _
    $region3: #{simsiam_forward.1} parent=1 // pred_check_branch
      %23 = sbr.rel (0) target = $region5
    $region4: #{simsiam_forward.1} parent=1 // pred_region
      _
    $region5: #{simsiam_forward.1} parent=1 // pred_fallthru
      _
    // Predicated region
    $region6: #{simsiam_forward.1} parent=1 // pred_check
      _
    $region7: #{simsiam_forward.1} parent=1 // pred_check_branch
      %25 = sbr.rel (0) target = $region9
    $region8: #{simsiam_forward.1} parent=1 // pred_region
      %s27 = ssub.s32 16384, 16384
      %28 = vsyncadd [#allocation3], %s27
      %s29 = sshll.u32 [#allocation2], 4
      %s30 = int_to_ptr.vmem [resolvable:$true] %s29
      %35 = dma.hbm_to_vmem [thread:$0]  %s1, 16384, %s30, [#allocation3], 128, 128, 8
    $region9: #{simsiam_forward.1} parent=1 // pred_fallthru
      _
    // Predicated region
    $region10: #{simsiam_forward.1} parent=1 // pred_check
      _
    $region11: #{simsiam_forward.1} parent=1 // pred_check_branch
      %37 = sbr.rel (0) target = $region13
    $region12: #{simsiam_forward.1} parent=1 // pred_region
      _
    $region13: #{simsiam_forward.1} parent=1 // pred_fallthru
      _
    // Predicated region
    $region14: #{simsiam_forward.1} parent=1 // pred_check
      _
    $region15: #{simsiam_forward.1} parent=1 // pred_check_branch
      %39 = sbr.rel (0) target = $region17
    $region16: #{simsiam_forward.1} parent=1 // pred_region
      _
    $region17: #{simsiam_forward.1} parent=1 // pred_fallthru
      _
    // Predicated region
    $region18: #{simsiam_forward.1} parent=1 // pred_check
      _
    $region19: #{simsiam_forward.1} parent=1 // pred_check_branch
      %41 = sbr.rel (0) target = $region21
    $region20: #{simsiam_forward.1} parent=1 // pred_region
      _
    $region21: #{simsiam_forward.1} parent=1 // pred_fallthru
      _
    // Predicated region
    $region22: #{simsiam_forward.1} parent=1 // pred_check
      _
    $region23: #{simsiam_forward.1} parent=1 // pred_check_branch
      %43 = sbr.rel (0) target = $region25
    $region24: #{simsiam_forward.1} parent=1 // pred_region
      _
    $region25: #{simsiam_forward.1} parent=1 // pred_fallthru
      _
    // Predicated region
    $region26: #{simsiam_forward.1} parent=1 // pred_check
      _
    $region27: #{simsiam_forward.1} parent=1 // pred_check_branch
      %45 = sbr.rel (0) target = $region29
    $region28: #{simsiam_forward.1} parent=1 // pred_region
      %s47 = ssub.s32 32, 32
      %48 = vsyncadd [#allocation5], %s47
      %s50 = sshll.u32 [#allocation4], 4
      %s51 = int_to_ptr.vmem [resolvable:$true] %s50
      %53 = dma.hbm_to_vmem [thread:$0]  %s6, 32, %s51, [#allocation5]
    $region29: #{simsiam_forward.1} parent=1 // pred_fallthru
      _
    // Predicated region
    $region30: #{simsiam_forward.1} parent=1 // pred_check
      _
    $region31: #{simsiam_forward.1} parent=1 // pred_check_branch
      %55 = sbr.rel (0) target = $region33
    $region32: #{simsiam_forward.1} parent=1 // pred_region
      %s57 = ssub.s32 4096, 4096
      %58 = vsyncadd [#allocation5], %s57
      %s59 = sshll.u32 [#allocation6], 4
      %s60 = int_to_ptr.vmem [resolvable:$true] %s59
      %65 = dma.hbm_to_vmem [thread:$0]  %s7, 4096, %s60, [#allocation5], 128, 128, 8
    $region33: #{simsiam_forward.1} parent=1 // pred_fallthru
      _
    // Predicated region
    $region34: #{simsiam_forward.1} parent=1 // pred_check
      _
    $region35: #{simsiam_forward.1} parent=1 // pred_check_branch
      %67 = sbr.rel (0) target = $region37
    $region36: #{simsiam_forward.1} parent=1 // pred_region
      %s69 = ssub.s32 32, 32
      %70 = vsyncadd [#allocation8], %s69
      %s72 = sshll.u32 [#allocation7], 4
      %s73 = int_to_ptr.vmem [resolvable:$true] %s72
      %75 = dma.hbm_to_vmem [thread:$0]  %s8, 32, %s73, [#allocation8]
    $region37: #{simsiam_forward.1} parent=1 // pred_fallthru
      _
    // Predicated region
    $region38: #{simsiam_forward.1} parent=1 // pred_check
      _
    $region39: #{simsiam_forward.1} parent=1 // pred_check_branch
      %77 = sbr.rel (0) target = $region41
    $region40: #{simsiam_forward.1} parent=1 // pred_region
      %s79 = ssub.s32 32, 32
      %80 = vsyncadd [#allocation8], %s79
      %s82 = sshll.u32 [#allocation9], 4
      %s83 = int_to_ptr.vmem [resolvable:$true] %s82
      %85 = dma.hbm_to_vmem [thread:$0]  %s9, 32, %s83, [#allocation8]
    $region41: #{simsiam_forward.1} parent=1 // pred_fallthru
      _
    // Predicated region
    $region42: #{simsiam_forward.1} parent=1 // pred_check
      _
    $region43: #{simsiam_forward.1} parent=1 // pred_check_branch
      %87 = sbr.rel (0) target = $region45
    $region44: #{simsiam_forward.1} parent=1 // pred_region
      _
    $region45: #{simsiam_forward.1} parent=1 // pred_fallthru
      _
    // Predicated region
    $region46: #{simsiam_forward.1} parent=1 // pred_check
      _
    $region47: #{simsiam_forward.1} parent=1 // pred_check_branch
      %89 = sbr.rel (0) target = $region49
    $region48: #{simsiam_forward.1} parent=1 // pred_region
      _
    $region49: #{simsiam_forward.1} parent=1 // pred_fallthru
      _
    // Predicated region
    $region50: #{simsiam_forward.1} parent=1 // pred_check
      _
    $region51: #{simsiam_forward.1} parent=1 // pred_check_branch
      %91 = sbr.rel (0) target = $region53
    $region52: #{simsiam_forward.1} parent=1 // pred_region
      %92 = dma.done [#allocation3], 16384
    $region53: #{simsiam_forward.1} parent=1 // pred_fallthru
      _
    // Predicated region
    $region54: #{simsiam_forward.1} parent=1 // pred_check
      _
    $region55: #{simsiam_forward.1} parent=1 // pred_check_branch
      %94 = sbr.rel (0) target = $region57
    $region56: #{simsiam_forward.1} parent=1 // pred_region
      %95 = dma.done [#allocation5], 32
    $region57: #{simsiam_forward.1} parent=1 // pred_fallthru
      _
    // Predicated region
    $region58: #{simsiam_forward.1} parent=1 // pred_check
      _
    $region59: #{simsiam_forward.1} parent=1 // pred_check_branch
      %97 = sbr.rel (0) target = $region61
    $region60: #{simsiam_forward.1} parent=1 // pred_region
      %98 = dma.done [#allocation5], 4096
    $region61: #{simsiam_forward.1} parent=1 // pred_fallthru
      _
    // Predicated region
    $region62: #{simsiam_forward.1} parent=1 // pred_check
      _
    $region63: #{simsiam_forward.1} parent=1 // pred_check_branch
      %100 = sbr.rel (0) target = $region65
    $region64: #{simsiam_forward.1} parent=1 // pred_region
      %101 = dma.done [#allocation8], 32
    $region65: #{simsiam_forward.1} parent=1 // pred_fallthru
      _
    // Predicated region
    $region66: #{simsiam_forward.1} parent=1 // pred_check
      _
    $region67: #{simsiam_forward.1} parent=1 // pred_check_branch
      %103 = sbr.rel (0) target = $region69
    $region68: #{simsiam_forward.1} parent=1 // pred_region
      %104 = dma.done [#allocation8], 32
    $region69: #{simsiam_forward.1} parent=1 // pred_fallthru
      _
    %v106 = vld [vmem:[%s0] sm:$0xff]
    %v107 = vld [vmem:[%s0 + $0x8] sm:$0xff]
    %v108 = vld [vmem:[%s0 + $0x10] sm:$0xff]
    %v109 = vld [vmem:[%s0 + $0x18] sm:$0xff]
    %v110 = vld [vmem:[%s0 + $0x20] sm:$0xff]
    %v111 = vld [vmem:[%s0 + $0x28] sm:$0xff]
    %v112 = vld [vmem:[%s0 + $0x30] sm:$0xff]
    %v113 = vld [vmem:[%s0 + $0x38] sm:$0xff]
    %v114 = vld [vmem:[#allocation2] sm:$0xff]
    %v115 = vld [vmem:[#allocation2 + $0x8] sm:$0xff]
    %v116 = vld [vmem:[#allocation2 + $0x10] sm:$0xff]
    %v117 = vld [vmem:[#allocation2 + $0x18] sm:$0xff]
    %v118 = vld [vmem:[#allocation2 + $0x20] sm:$0xff]
    %v119 = vld [vmem:[#allocation2 + $0x28] sm:$0xff]
    %v120 = vld [vmem:[#allocation2 + $0x30] sm:$0xff]
    %v121 = vld [vmem:[#allocation2 + $0x38] sm:$0xff]
    %v122 = vld [vmem:[#allocation2 + $0x40] sm:$0xff]
    %v123 = vld [vmem:[#allocation2 + $0x48] sm:$0xff]
    %v124 = vld [vmem:[#allocation2 + $0x50] sm:$0xff]
    %v125 = vld [vmem:[#allocation2 + $0x58] sm:$0xff]
    %v126 = vld [vmem:[#allocation2 + $0x60] sm:$0xff]
    %v127 = vld [vmem:[#allocation2 + $0x68] sm:$0xff]
    %v128 = vld [vmem:[#allocation2 + $0x70] sm:$0xff]
    %v129 = vld [vmem:[#allocation2 + $0x78] sm:$0xff]
    %v130 = vld [vmem:[#allocation2 + $0x80] sm:$0xff]
    %v131 = vld [vmem:[#allocation2 + $0x88] sm:$0xff]
    %v132 = vld [vmem:[#allocation2 + $0x90] sm:$0xff]
    %v133 = vld [vmem:[#allocation2 + $0x98] sm:$0xff]
    %v134 = vld [vmem:[#allocation2 + $0xa0] sm:$0xff]
    %v135 = vld [vmem:[#allocation2 + $0xa8] sm:$0xff]
    %v136 = vld [vmem:[#allocation2 + $0xb0] sm:$0xff]
    %v137 = vld [vmem:[#allocation2 + $0xb8] sm:$0xff]
    %v138 = vld [vmem:[#allocation2 + $0xc0] sm:$0xff]
    %v139 = vld [vmem:[#allocation2 + $0xc8] sm:$0xff]
    %v140 = vld [vmem:[#allocation2 + $0xd0] sm:$0xff]
    %v141 = vld [vmem:[#allocation2 + $0xd8] sm:$0xff]
    %v142 = vld [vmem:[#allocation2 + $0xe0] sm:$0xff]
    %v143 = vld [vmem:[#allocation2 + $0xe8] sm:$0xff]
    %v144 = vld [vmem:[#allocation2 + $0xf0] sm:$0xff]
    %v145 = vld [vmem:[#allocation2 + $0xf8] sm:$0xff]
    %v146 = vld [vmem:[#allocation2 + $0x100] sm:$0xff]
    %v147 = vld [vmem:[#allocation2 + $0x108] sm:$0xff]
    %v148 = vld [vmem:[#allocation2 + $0x110] sm:$0xff]
    %v149 = vld [vmem:[#allocation2 + $0x118] sm:$0xff]
    %v150 = vld [vmem:[#allocation2 + $0x120] sm:$0xff]
    %v151 = vld [vmem:[#allocation2 + $0x128] sm:$0xff]
    %v152 = vld [vmem:[#allocation2 + $0x130] sm:$0xff]
    %v153 = vld [vmem:[#allocation2 + $0x138] sm:$0xff]
    %v154 = vld [vmem:[#allocation2 + $0x140] sm:$0xff]
    %v155 = vld [vmem:[#allocation2 + $0x148] sm:$0xff]
    %v156 = vld [vmem:[#allocation2 + $0x150] sm:$0xff]
    %v157 = vld [vmem:[#allocation2 + $0x158] sm:$0xff]
    %v158 = vld [vmem:[#allocation2 + $0x160] sm:$0xff]
    %v159 = vld [vmem:[#allocation2 + $0x168] sm:$0xff]
    %v160 = vld [vmem:[#allocation2 + $0x170] sm:$0xff]
    %v161 = vld [vmem:[#allocation2 + $0x178] sm:$0xff]
    %v162 = vld [vmem:[#allocation2 + $0x180] sm:$0xff]
    %v163 = vld [vmem:[#allocation2 + $0x188] sm:$0xff]
    %v164 = vld [vmem:[#allocation2 + $0x190] sm:$0xff]
    %v165 = vld [vmem:[#allocation2 + $0x198] sm:$0xff]
    %v166 = vld [vmem:[#allocation2 + $0x1a0] sm:$0xff]
    %v167 = vld [vmem:[#allocation2 + $0x1a8] sm:$0xff]
    %v168 = vld [vmem:[#allocation2 + $0x1b0] sm:$0xff]
    %v169 = vld [vmem:[#allocation2 + $0x1b8] sm:$0xff]
    %v170 = vld [vmem:[#allocation2 + $0x1c0] sm:$0xff]
    %v171 = vld [vmem:[#allocation2 + $0x1c8] sm:$0xff]
    %v172 = vld [vmem:[#allocation2 + $0x1d0] sm:$0xff]
    %v173 = vld [vmem:[#allocation2 + $0x1d8] sm:$0xff]
    %v174 = vld [vmem:[#allocation2 + $0x1e0] sm:$0xff]
    %v175 = vld [vmem:[#allocation2 + $0x1e8] sm:$0xff]
    %v176 = vld [vmem:[#allocation2 + $0x1f0] sm:$0xff]
    %v177 = vld [vmem:[#allocation2 + $0x1f8] sm:$0xff]
    %v178 = vld [vmem:[#allocation2 + $0x200] sm:$0xff]
    %v179 = vld [vmem:[#allocation2 + $0x208] sm:$0xff]
    %v180 = vld [vmem:[#allocation2 + $0x210] sm:$0xff]
    %v181 = vld [vmem:[#allocation2 + $0x218] sm:$0xff]
    %v182 = vld [vmem:[#allocation2 + $0x220] sm:$0xff]
    %v183 = vld [vmem:[#allocation2 + $0x228] sm:$0xff]
    %v184 = vld [vmem:[#allocation2 + $0x230] sm:$0xff]
    %v185 = vld [vmem:[#allocation2 + $0x238] sm:$0xff]
    %v186 = vld [vmem:[#allocation2 + $0x240] sm:$0xff]
    %v187 = vld [vmem:[#allocation2 + $0x248] sm:$0xff]
    %v188 = vld [vmem:[#allocation2 + $0x250] sm:$0xff]
    %v189 = vld [vmem:[#allocation2 + $0x258] sm:$0xff]
    %v190 = vld [vmem:[#allocation2 + $0x260] sm:$0xff]
    %v191 = vld [vmem:[#allocation2 + $0x268] sm:$0xff]
    %v192 = vld [vmem:[#allocation2 + $0x270] sm:$0xff]
    %v193 = vld [vmem:[#allocation2 + $0x278] sm:$0xff]
    %v194 = vld [vmem:[#allocation2 + $0x280] sm:$0xff]
    %v195 = vld [vmem:[#allocation2 + $0x288] sm:$0xff]
    %v196 = vld [vmem:[#allocation2 + $0x290] sm:$0xff]
    %v197 = vld [vmem:[#allocation2 + $0x298] sm:$0xff]
    %v198 = vld [vmem:[#allocation2 + $0x2a0] sm:$0xff]
    %v199 = vld [vmem:[#allocation2 + $0x2a8] sm:$0xff]
    %v200 = vld [vmem:[#allocation2 + $0x2b0] sm:$0xff]
    %v201 = vld [vmem:[#allocation2 + $0x2b8] sm:$0xff]
    %v202 = vld [vmem:[#allocation2 + $0x2c0] sm:$0xff]
    %v203 = vld [vmem:[#allocation2 + $0x2c8] sm:$0xff]
    %v204 = vld [vmem:[#allocation2 + $0x2d0] sm:$0xff]
    %v205 = vld [vmem:[#allocation2 + $0x2d8] sm:$0xff]
    %v206 = vld [vmem:[#allocation2 + $0x2e0] sm:$0xff]
    %v207 = vld [vmem:[#allocation2 + $0x2e8] sm:$0xff]
    %v208 = vld [vmem:[#allocation2 + $0x2f0] sm:$0xff]
    %v209 = vld [vmem:[#allocation2 + $0x2f8] sm:$0xff]
    %v210 = vld [vmem:[#allocation2 + $0x300] sm:$0xff]
    %v211 = vld [vmem:[#allocation2 + $0x308] sm:$0xff]
    %v212 = vld [vmem:[#allocation2 + $0x310] sm:$0xff]
    %v213 = vld [vmem:[#allocation2 + $0x318] sm:$0xff]
    %v214 = vld [vmem:[#allocation2 + $0x320] sm:$0xff]
    %v215 = vld [vmem:[#allocation2 + $0x328] sm:$0xff]
    %v216 = vld [vmem:[#allocation2 + $0x330] sm:$0xff]
    %v217 = vld [vmem:[#allocation2 + $0x338] sm:$0xff]
    %v218 = vld [vmem:[#allocation2 + $0x340] sm:$0xff]
    %v219 = vld [vmem:[#allocation2 + $0x348] sm:$0xff]
    %v220 = vld [vmem:[#allocation2 + $0x350] sm:$0xff]
    %v221 = vld [vmem:[#allocation2 + $0x358] sm:$0xff]
    %v222 = vld [vmem:[#allocation2 + $0x360] sm:$0xff]
    %v223 = vld [vmem:[#allocation2 + $0x368] sm:$0xff]
    %v224 = vld [vmem:[#allocation2 + $0x370] sm:$0xff]
    %v225 = vld [vmem:[#allocation2 + $0x378] sm:$0xff]
    %v226 = vld [vmem:[#allocation2 + $0x380] sm:$0xff]
    %v227 = vld [vmem:[#allocation2 + $0x388] sm:$0xff]
    %v228 = vld [vmem:[#allocation2 + $0x390] sm:$0xff]
    %v229 = vld [vmem:[#allocation2 + $0x398] sm:$0xff]
    %v230 = vld [vmem:[#allocation2 + $0x3a0] sm:$0xff]
    %v231 = vld [vmem:[#allocation2 + $0x3a8] sm:$0xff]
    %v232 = vld [vmem:[#allocation2 + $0x3b0] sm:$0xff]
    %v233 = vld [vmem:[#allocation2 + $0x3b8] sm:$0xff]
    %v234 = vld [vmem:[#allocation2 + $0x3c0] sm:$0xff]
    %v235 = vld [vmem:[#allocation2 + $0x3c8] sm:$0xff]
    %v236 = vld [vmem:[#allocation2 + $0x3d0] sm:$0xff]
    %v237 = vld [vmem:[#allocation2 + $0x3d8] sm:$0xff]
    %v238 = vld [vmem:[#allocation2 + $0x3e0] sm:$0xff]
    %v239 = vld [vmem:[#allocation2 + $0x3e8] sm:$0xff]
    %v240 = vld [vmem:[#allocation2 + $0x3f0] sm:$0xff]
    %v241 = vld [vmem:[#allocation2 + $0x3f8] sm:$0xff]
    %v242 = vld [vmem:[%s2] sm:$0x3]
    %v244 = vlaneseq
    %v245 = vshrl.u32 %v244, 7
    %v246 = vsub.s32 0, %v245
    %v247 = vrot.slane %v242, %v246
    %v248 = vlaneseq
    %v249 = vshrl.u32 %v248, 7
    %v250 = vsub.s32 1, %v249
    %v251 = vrot.slane %v242, %v250
    %v262 = vunpack.c.l.b16 %v106
    %v263 = vunpack.c.h.b16 %v106
    %v264 = vunpack.c.l.b16 %v107
    %v265 = vunpack.c.h.b16 %v107
    %v266 = vunpack.c.l.b16 %v108
    %v267 = vunpack.c.h.b16 %v108
    %v268 = vunpack.c.l.b16 %v109
    %v269 = vunpack.c.h.b16 %v109
    %v270 = vunpack.c.l.b16 %v110
    %v271 = vunpack.c.h.b16 %v110
    %v272 = vunpack.c.l.b16 %v111
    %v273 = vunpack.c.h.b16 %v111
    %v274 = vunpack.c.l.b16 %v112
    %v275 = vunpack.c.h.b16 %v112
    %v276 = vunpack.c.l.b16 %v113
    %v277 = vunpack.c.h.b16 %v113
    %v278 = vpack.c.b16 %v270, %v262
    %v279 = vpack.c.b16 %v271, %v263
    %v280 = vpack.c.b16 %v272, %v264
    %v281 = vpack.c.b16 %v273, %v265
    %v282 = vpack.c.b16 %v274, %v266
    %v283 = vpack.c.b16 %v275, %v267
    %v284 = vpack.c.b16 %v276, %v268
    %v285 = vpack.c.b16 %v277, %v269
    %v422 = vunpack.c.l.b16 %v114
    %v423 = vunpack.c.h.b16 %v114
    %v424 = vunpack.c.l.b16 %v115
    %v425 = vunpack.c.h.b16 %v115
    %v426 = vunpack.c.l.b16 %v116
    %v427 = vunpack.c.h.b16 %v116
    %v428 = vunpack.c.l.b16 %v117
    %v429 = vunpack.c.h.b16 %v117
    %v430 = vunpack.c.l.b16 %v118
    %v431 = vunpack.c.h.b16 %v118
    %v432 = vunpack.c.l.b16 %v119
    %v433 = vunpack.c.h.b16 %v119
    %v434 = vunpack.c.l.b16 %v120
    %v435 = vunpack.c.h.b16 %v120
    %v436 = vunpack.c.l.b16 %v121
    %v437 = vunpack.c.h.b16 %v121
    %v438 = vunpack.c.l.b16 %v122
    %v439 = vunpack.c.h.b16 %v122
    %v440 = vunpack.c.l.b16 %v123
    %v441 = vunpack.c.h.b16 %v123
    %v442 = vunpack.c.l.b16 %v124
    %v443 = vunpack.c.h.b16 %v124
    %v444 = vunpack.c.l.b16 %v125
    %v445 = vunpack.c.h.b16 %v125
    %v446 = vunpack.c.l.b16 %v126
    %v447 = vunpack.c.h.b16 %v126
    %v448 = vunpack.c.l.b16 %v127
    %v449 = vunpack.c.h.b16 %v127
    %v450 = vunpack.c.l.b16 %v128
    %v451 = vunpack.c.h.b16 %v128
    %v452 = vunpack.c.l.b16 %v129
    %v453 = vunpack.c.h.b16 %v129
    %v454 = vunpack.c.l.b16 %v130
    %v455 = vunpack.c.h.b16 %v130
    %v456 = vunpack.c.l.b16 %v131
    %v457 = vunpack.c.h.b16 %v131
    %v458 = vunpack.c.l.b16 %v132
    %v459 = vunpack.c.h.b16 %v132
    %v460 = vunpack.c.l.b16 %v133
    %v461 = vunpack.c.h.b16 %v133
    %v462 = vunpack.c.l.b16 %v134
    %v463 = vunpack.c.h.b16 %v134
    %v464 = vunpack.c.l.b16 %v135
    %v465 = vunpack.c.h.b16 %v135
    %v466 = vunpack.c.l.b16 %v136
    %v467 = vunpack.c.h.b16 %v136
    %v468 = vunpack.c.l.b16 %v137
    %v469 = vunpack.c.h.b16 %v137
    %v470 = vunpack.c.l.b16 %v138
    %v471 = vunpack.c.h.b16 %v138
    %v472 = vunpack.c.l.b16 %v139
    %v473 = vunpack.c.h.b16 %v139
    %v474 = vunpack.c.l.b16 %v140
    %v475 = vunpack.c.h.b16 %v140
    %v476 = vunpack.c.l.b16 %v141
    %v477 = vunpack.c.h.b16 %v141
    %v478 = vunpack.c.l.b16 %v142
    %v479 = vunpack.c.h.b16 %v142
    %v480 = vunpack.c.l.b16 %v143
    %v481 = vunpack.c.h.b16 %v143
    %v482 = vunpack.c.l.b16 %v144
    %v483 = vunpack.c.h.b16 %v144
    %v484 = vunpack.c.l.b16 %v145
    %v485 = vunpack.c.h.b16 %v145
    %v486 = vunpack.c.l.b16 %v146
    %v487 = vunpack.c.h.b16 %v146
    %v488 = vunpack.c.l.b16 %v147
    %v489 = vunpack.c.h.b16 %v147
    %v490 = vunpack.c.l.b16 %v148
    %v491 = vunpack.c.h.b16 %v148
    %v492 = vunpack.c.l.b16 %v149
    %v493 = vunpack.c.h.b16 %v149
    %v494 = vunpack.c.l.b16 %v150
    %v495 = vunpack.c.h.b16 %v150
    %v496 = vunpack.c.l.b16 %v151
    %v497 = vunpack.c.h.b16 %v151
    %v498 = vunpack.c.l.b16 %v152
    %v499 = vunpack.c.h.b16 %v152
    %v500 = vunpack.c.l.b16 %v153
    %v501 = vunpack.c.h.b16 %v153
    %v502 = vunpack.c.l.b16 %v154
    %v503 = vunpack.c.h.b16 %v154
    %v504 = vunpack.c.l.b16 %v155
    %v505 = vunpack.c.h.b16 %v155
    %v506 = vunpack.c.l.b16 %v156
    %v507 = vunpack.c.h.b16 %v156
    %v508 = vunpack.c.l.b16 %v157
    %v509 = vunpack.c.h.b16 %v157
    %v510 = vunpack.c.l.b16 %v158
    %v511 = vunpack.c.h.b16 %v158
    %v512 = vunpack.c.l.b16 %v159
    %v513 = vunpack.c.h.b16 %v159
    %v514 = vunpack.c.l.b16 %v160
    %v515 = vunpack.c.h.b16 %v160
    %v516 = vunpack.c.l.b16 %v161
    %v517 = vunpack.c.h.b16 %v161
    %v518 = vunpack.c.l.b16 %v162
    %v519 = vunpack.c.h.b16 %v162
    %v520 = vunpack.c.l.b16 %v163
    %v521 = vunpack.c.h.b16 %v163
    %v522 = vunpack.c.l.b16 %v164
    %v523 = vunpack.c.h.b16 %v164
    %v524 = vunpack.c.l.b16 %v165
    %v525 = vunpack.c.h.b16 %v165
    %v526 = vunpack.c.l.b16 %v166
    %v527 = vunpack.c.h.b16 %v166
    %v528 = vunpack.c.l.b16 %v167
    %v529 = vunpack.c.h.b16 %v167
    %v530 = vunpack.c.l.b16 %v168
    %v531 = vunpack.c.h.b16 %v168
    %v532 = vunpack.c.l.b16 %v169
    %v533 = vunpack.c.h.b16 %v169
    %v534 = vunpack.c.l.b16 %v170
    %v535 = vunpack.c.h.b16 %v170
    %v536 = vunpack.c.l.b16 %v171
    %v537 = vunpack.c.h.b16 %v171
    %v538 = vunpack.c.l.b16 %v172
    %v539 = vunpack.c.h.b16 %v172
    %v540 = vunpack.c.l.b16 %v173
    %v541 = vunpack.c.h.b16 %v173
    %v542 = vunpack.c.l.b16 %v174
    %v543 = vunpack.c.h.b16 %v174
    %v544 = vunpack.c.l.b16 %v175
    %v545 = vunpack.c.h.b16 %v175
    %v546 = vunpack.c.l.b16 %v176
    %v547 = vunpack.c.h.b16 %v176
    %v548 = vunpack.c.l.b16 %v177
    %v549 = vunpack.c.h.b16 %v177
    %v550 = vunpack.c.l.b16 %v178
    %v551 = vunpack.c.h.b16 %v178
    %v552 = vunpack.c.l.b16 %v179
    %v553 = vunpack.c.h.b16 %v179
    %v554 = vunpack.c.l.b16 %v180
    %v555 = vunpack.c.h.b16 %v180
    %v556 = vunpack.c.l.b16 %v181
    %v557 = vunpack.c.h.b16 %v181
    %v558 = vunpack.c.l.b16 %v182
    %v559 = vunpack.c.h.b16 %v182
    %v560 = vunpack.c.l.b16 %v183
    %v561 = vunpack.c.h.b16 %v183
    %v562 = vunpack.c.l.b16 %v184
    %v563 = vunpack.c.h.b16 %v184
    %v564 = vunpack.c.l.b16 %v185
    %v565 = vunpack.c.h.b16 %v185
    %v566 = vunpack.c.l.b16 %v186
    %v567 = vunpack.c.h.b16 %v186
    %v568 = vunpack.c.l.b16 %v187
    %v569 = vunpack.c.h.b16 %v187
    %v570 = vunpack.c.l.b16 %v188
    %v571 = vunpack.c.h.b16 %v188
    %v572 = vunpack.c.l.b16 %v189
    %v573 = vunpack.c.h.b16 %v189
    %v574 = vunpack.c.l.b16 %v190
    %v575 = vunpack.c.h.b16 %v190
    %v576 = vunpack.c.l.b16 %v191
    %v577 = vunpack.c.h.b16 %v191
    %v578 = vunpack.c.l.b16 %v192
    %v579 = vunpack.c.h.b16 %v192
    %v580 = vunpack.c.l.b16 %v193
    %v581 = vunpack.c.h.b16 %v193
    %v582 = vunpack.c.l.b16 %v194
    %v583 = vunpack.c.h.b16 %v194
    %v584 = vunpack.c.l.b16 %v195
    %v585 = vunpack.c.h.b16 %v195
    %v586 = vunpack.c.l.b16 %v196
    %v587 = vunpack.c.h.b16 %v196
    %v588 = vunpack.c.l.b16 %v197
    %v589 = vunpack.c.h.b16 %v197
    %v590 = vunpack.c.l.b16 %v198
    %v591 = vunpack.c.h.b16 %v198
    %v592 = vunpack.c.l.b16 %v199
    %v593 = vunpack.c.h.b16 %v199
    %v594 = vunpack.c.l.b16 %v200
    %v595 = vunpack.c.h.b16 %v200
    %v596 = vunpack.c.l.b16 %v201
    %v597 = vunpack.c.h.b16 %v201
    %v598 = vunpack.c.l.b16 %v202
    %v599 = vunpack.c.h.b16 %v202
    %v600 = vunpack.c.l.b16 %v203
    %v601 = vunpack.c.h.b16 %v203
    %v602 = vunpack.c.l.b16 %v204
    %v603 = vunpack.c.h.b16 %v204
    %v604 = vunpack.c.l.b16 %v205
    %v605 = vunpack.c.h.b16 %v205
    %v606 = vunpack.c.l.b16 %v206
    %v607 = vunpack.c.h.b16 %v206
    %v608 = vunpack.c.l.b16 %v207
    %v609 = vunpack.c.h.b16 %v207
    %v610 = vunpack.c.l.b16 %v208
    %v611 = vunpack.c.h.b16 %v208
    %v612 = vunpack.c.l.b16 %v209
    %v613 = vunpack.c.h.b16 %v209
    %v614 = vunpack.c.l.b16 %v210
    %v615 = vunpack.c.h.b16 %v210
    %v616 = vunpack.c.l.b16 %v211
    %v617 = vunpack.c.h.b16 %v211
    %v618 = vunpack.c.l.b16 %v212
    %v619 = vunpack.c.h.b16 %v212
    %v620 = vunpack.c.l.b16 %v213
    %v621 = vunpack.c.h.b16 %v213
    %v622 = vunpack.c.l.b16 %v214
    %v623 = vunpack.c.h.b16 %v214
    %v624 = vunpack.c.l.b16 %v215
    %v625 = vunpack.c.h.b16 %v215
    %v626 = vunpack.c.l.b16 %v216
    %v627 = vunpack.c.h.b16 %v216
    %v628 = vunpack.c.l.b16 %v217
    %v629 = vunpack.c.h.b16 %v217
    %v630 = vunpack.c.l.b16 %v218
    %v631 = vunpack.c.h.b16 %v218
    %v632 = vunpack.c.l.b16 %v219
    %v633 = vunpack.c.h.b16 %v219
    %v634 = vunpack.c.l.b16 %v220
    %v635 = vunpack.c.h.b16 %v220
    %v636 = vunpack.c.l.b16 %v221
    %v637 = vunpack.c.h.b16 %v221
    %v638 = vunpack.c.l.b16 %v222
    %v639 = vunpack.c.h.b16 %v222
    %v640 = vunpack.c.l.b16 %v223
    %v641 = vunpack.c.h.b16 %v223
    %v642 = vunpack.c.l.b16 %v224
    %v643 = vunpack.c.h.b16 %v224
    %v644 = vunpack.c.l.b16 %v225
    %v645 = vunpack.c.h.b16 %v225
    %v646 = vunpack.c.l.b16 %v226
    %v647 = vunpack.c.h.b16 %v226
    %v648 = vunpack.c.l.b16 %v227
    %v649 = vunpack.c.h.b16 %v227
    %v650 = vunpack.c.l.b16 %v228
    %v651 = vunpack.c.h.b16 %v228
    %v652 = vunpack.c.l.b16 %v229
    %v653 = vunpack.c.h.b16 %v229
    %v654 = vunpack.c.l.b16 %v230
    %v655 = vunpack.c.h.b16 %v230
    %v656 = vunpack.c.l.b16 %v231
    %v657 = vunpack.c.h.b16 %v231
    %v658 = vunpack.c.l.b16 %v232
    %v659 = vunpack.c.h.b16 %v232
    %v660 = vunpack.c.l.b16 %v233
    %v661 = vunpack.c.h.b16 %v233
    %v662 = vunpack.c.l.b16 %v234
    %v663 = vunpack.c.h.b16 %v234
    %v664 = vunpack.c.l.b16 %v235
    %v665 = vunpack.c.h.b16 %v235
    %v666 = vunpack.c.l.b16 %v236
    %v667 = vunpack.c.h.b16 %v236
    %v668 = vunpack.c.l.b16 %v237
    %v669 = vunpack.c.h.b16 %v237
    %v670 = vunpack.c.l.b16 %v238
    %v671 = vunpack.c.h.b16 %v238
    %v672 = vunpack.c.l.b16 %v239
    %v673 = vunpack.c.h.b16 %v239
    %v674 = vunpack.c.l.b16 %v240
    %v675 = vunpack.c.h.b16 %v240
    %v676 = vunpack.c.l.b16 %v241
    %v677 = vunpack.c.h.b16 %v241
    %v678 = vpack.c.b16 %v424, %v422
    %v679 = vpack.c.b16 %v425, %v423
    %v680 = vpack.c.b16 %v428, %v426
    %v681 = vpack.c.b16 %v429, %v427
    %v682 = vpack.c.b16 %v432, %v430
    %v683 = vpack.c.b16 %v433, %v431
    %v684 = vpack.c.b16 %v436, %v434
    %v685 = vpack.c.b16 %v437, %v435
    %v686 = vpack.c.b16 %v440, %v438
    %v687 = vpack.c.b16 %v441, %v439
    %v688 = vpack.c.b16 %v444, %v442
    %v689 = vpack.c.b16 %v445, %v443
    %v690 = vpack.c.b16 %v448, %v446
    %v691 = vpack.c.b16 %v449, %v447
    %v692 = vpack.c.b16 %v452, %v450
    %v693 = vpack.c.b16 %v453, %v451
    %v694 = vpack.c.b16 %v456, %v454
    %v695 = vpack.c.b16 %v457, %v455
    %v696 = vpack.c.b16 %v460, %v458
    %v697 = vpack.c.b16 %v461, %v459
    %v698 = vpack.c.b16 %v464, %v462
    %v699 = vpack.c.b16 %v465, %v463
    %v700 = vpack.c.b16 %v468, %v466
    %v701 = vpack.c.b16 %v469, %v467
    %v702 = vpack.c.b16 %v472, %v470
    %v703 = vpack.c.b16 %v473, %v471
    %v704 = vpack.c.b16 %v476, %v474
    %v705 = vpack.c.b16 %v477, %v475
    %v706 = vpack.c.b16 %v480, %v478
    %v707 = vpack.c.b16 %v481, %v479
    %v708 = vpack.c.b16 %v484, %v482
    %v709 = vpack.c.b16 %v485, %v483
    %v710 = vpack.c.b16 %v488, %v486
    %v711 = vpack.c.b16 %v489, %v487
    %v712 = vpack.c.b16 %v492, %v490
    %v713 = vpack.c.b16 %v493, %v491
    %v714 = vpack.c.b16 %v496, %v494
    %v715 = vpack.c.b16 %v497, %v495
    %v716 = vpack.c.b16 %v500, %v498
    %v717 = vpack.c.b16 %v501, %v499
    %v718 = vpack.c.b16 %v504, %v502
    %v719 = vpack.c.b16 %v505, %v503
    %v720 = vpack.c.b16 %v508, %v506
    %v721 = vpack.c.b16 %v509, %v507
    %v722 = vpack.c.b16 %v512, %v510
    %v723 = vpack.c.b16 %v513, %v511
    %v724 = vpack.c.b16 %v516, %v514
    %v725 = vpack.c.b16 %v517, %v515
    %v726 = vpack.c.b16 %v520, %v518
    %v727 = vpack.c.b16 %v521, %v519
    %v728 = vpack.c.b16 %v524, %v522
    %v729 = vpack.c.b16 %v525, %v523
    %v730 = vpack.c.b16 %v528, %v526
    %v731 = vpack.c.b16 %v529, %v527
    %v732 = vpack.c.b16 %v532, %v530
    %v733 = vpack.c.b16 %v533, %v531
    %v734 = vpack.c.b16 %v536, %v534
    %v735 = vpack.c.b16 %v537, %v535
    %v736 = vpack.c.b16 %v540, %v538
    %v737 = vpack.c.b16 %v541, %v539
    %v738 = vpack.c.b16 %v544, %v542
    %v739 = vpack.c.b16 %v545, %v543
    %v740 = vpack.c.b16 %v548, %v546
    %v741 = vpack.c.b16 %v549, %v547
    %v742 = vpack.c.b16 %v552, %v550
    %v743 = vpack.c.b16 %v553, %v551
    %v744 = vpack.c.b16 %v556, %v554
    %v745 = vpack.c.b16 %v557, %v555
    %v746 = vpack.c.b16 %v560, %v558
    %v747 = vpack.c.b16 %v561, %v559
    %v748 = vpack.c.b16 %v564, %v562
    %v749 = vpack.c.b16 %v565, %v563
    %v750 = vpack.c.b16 %v568, %v566
    %v751 = vpack.c.b16 %v569, %v567
    %v752 = vpack.c.b16 %v572, %v570
    %v753 = vpack.c.b16 %v573, %v571
    %v754 = vpack.c.b16 %v576, %v574
    %v755 = vpack.c.b16 %v577, %v575
    %v756 = vpack.c.b16 %v580, %v578
    %v757 = vpack.c.b16 %v581, %v579
    %v758 = vpack.c.b16 %v584, %v582
    %v759 = vpack.c.b16 %v585, %v583
    %v760 = vpack.c.b16 %v588, %v586
    %v761 = vpack.c.b16 %v589, %v587
    %v762 = vpack.c.b16 %v592, %v590
    %v763 = vpack.c.b16 %v593, %v591
    %v764 = vpack.c.b16 %v596, %v594
    %v765 = vpack.c.b16 %v597, %v595
    %v766 = vpack.c.b16 %v600, %v598
    %v767 = vpack.c.b16 %v601, %v599
    %v768 = vpack.c.b16 %v604, %v602
    %v769 = vpack.c.b16 %v605, %v603
    %v770 = vpack.c.b16 %v608, %v606
    %v771 = vpack.c.b16 %v609, %v607
    %v772 = vpack.c.b16 %v612, %v610
    %v773 = vpack.c.b16 %v613, %v611
    %v774 = vpack.c.b16 %v616, %v614
    %v775 = vpack.c.b16 %v617, %v615
    %v776 = vpack.c.b16 %v620, %v618
    %v777 = vpack.c.b16 %v621, %v619
    %v778 = vpack.c.b16 %v624, %v622
    %v779 = vpack.c.b16 %v625, %v623
    %v780 = vpack.c.b16 %v628, %v626
    %v781 = vpack.c.b16 %v629, %v627
    %v782 = vpack.c.b16 %v632, %v630
    %v783 = vpack.c.b16 %v633, %v631
    %v784 = vpack.c.b16 %v636, %v634
    %v785 = vpack.c.b16 %v637, %v635
    %v786 = vpack.c.b16 %v640, %v638
    %v787 = vpack.c.b16 %v641, %v639
    %v788 = vpack.c.b16 %v644, %v642
    %v789 = vpack.c.b16 %v645, %v643
    %v790 = vpack.c.b16 %v648, %v646
    %v791 = vpack.c.b16 %v649, %v647
    %v792 = vpack.c.b16 %v652, %v650
    %v793 = vpack.c.b16 %v653, %v651
    %v794 = vpack.c.b16 %v656, %v654
    %v795 = vpack.c.b16 %v657, %v655
    %v796 = vpack.c.b16 %v660, %v658
    %v797 = vpack.c.b16 %v661, %v659
    %v798 = vpack.c.b16 %v664, %v662
    %v799 = vpack.c.b16 %v665, %v663
    %v800 = vpack.c.b16 %v668, %v666
    %v801 = vpack.c.b16 %v669, %v667
    %v802 = vpack.c.b16 %v672, %v670
    %v803 = vpack.c.b16 %v673, %v671
    %v804 = vpack.c.b16 %v676, %v674
    %v805 = vpack.c.b16 %v677, %v675
    %934 = vmatprep.subr.bf16.mxu0 %v679
    %935 = vmatpush1.bf16.msra.mxu0 %v678
    %936 = vmatprep.subr.bf16.mxu0 %v681
    %937 = vmatpush1.bf16.msra.mxu0 %v680
    %938 = vmatprep.subr.bf16.mxu0 %v683
    %939 = vmatpush1.bf16.msra.mxu0 %v682
    %940 = vmatprep.subr.bf16.mxu0 %v685
    %941 = vmatpush1.bf16.msra.mxu0 %v684
    %942 = vmatprep.subr.bf16.mxu0 %v687
    %943 = vmatpush1.bf16.msra.mxu0 %v686
    %944 = vmatprep.subr.bf16.mxu0 %v689
    %945 = vmatpush1.bf16.msra.mxu0 %v688
    %946 = vmatprep.subr.bf16.mxu0 %v691
    %947 = vmatpush1.bf16.msra.mxu0 %v690
    %948 = vmatprep.subr.bf16.mxu0 %v693
    %949 = vmatpush1.bf16.msra.mxu0 %v692
    %950 = vmatprep.subr.bf16.mxu0 %v695
    %951 = vmatpush1.bf16.msra.mxu0 %v694
    %952 = vmatprep.subr.bf16.mxu0 %v697
    %953 = vmatpush1.bf16.msra.mxu0 %v696
    %954 = vmatprep.subr.bf16.mxu0 %v699
    %955 = vmatpush1.bf16.msra.mxu0 %v698
    %956 = vmatprep.subr.bf16.mxu0 %v701
    %957 = vmatpush1.bf16.msra.mxu0 %v700
    %958 = vmatprep.subr.bf16.mxu0 %v703
    %959 = vmatpush1.bf16.msra.mxu0 %v702
    %960 = vmatprep.subr.bf16.mxu0 %v705
    %961 = vmatpush1.bf16.msra.mxu0 %v704
    %962 = vmatprep.subr.bf16.mxu0 %v707
    %963 = vmatpush1.bf16.msra.mxu0 %v706
    %964 = vmatprep.subr.bf16.mxu0 %v709
    %965 = vmatpush1.bf16.msra.mxu0 %v708
    %966 = vmatprep.mubr.bf16.mxu0 %v279
    %967 = vmatmul.mubr.bf16.gmra.mrb[0].mxu0 %v278
    %v968 = vpop.f32.mrb[0].mxu0
    %v969 = vadd.f32 %v247, %v968
    %v970 = vpop.f32.mrb[0].mxu0
    %v971 = vadd.f32 %v251, %v970
    %v972 = vpop.f32.mrb[0].mxu0
    %v973 = vadd.f32 %v247, %v972
    %v974 = vpop.f32.mrb[0].mxu0
    %v975 = vadd.f32 %v251, %v974
    %976 = vdwg.mxu0
    %977 = vmatprep.subr.bf16.mxu0 %v711
    %978 = vmatpush1.bf16.msra.mxu0 %v710
    %979 = vmatprep.subr.bf16.mxu0 %v713
    %980 = vmatpush1.bf16.msra.mxu0 %v712
    %981 = vmatprep.subr.bf16.mxu0 %v715
    %982 = vmatpush1.bf16.msra.mxu0 %v714
    %983 = vmatprep.subr.bf16.mxu0 %v717
    %984 = vmatpush1.bf16.msra.mxu0 %v716
    %985 = vmatprep.subr.bf16.mxu0 %v719
    %986 = vmatpush1.bf16.msra.mxu0 %v718
    %987 = vmatprep.subr.bf16.mxu0 %v721
    %988 = vmatpush1.bf16.msra.mxu0 %v720
    %989 = vmatprep.subr.bf16.mxu0 %v723
    %990 = vmatpush1.bf16.msra.mxu0 %v722
    %991 = vmatprep.subr.bf16.mxu0 %v725
    %992 = vmatpush1.bf16.msra.mxu0 %v724
    %993 = vmatprep.subr.bf16.mxu0 %v727
    %994 = vmatpush1.bf16.msra.mxu0 %v726
    %995 = vmatprep.subr.bf16.mxu0 %v729
    %996 = vmatpush1.bf16.msra.mxu0 %v728
    %997 = vmatprep.subr.bf16.mxu0 %v731
    %998 = vmatpush1.bf16.msra.mxu0 %v730
    %999 = vmatprep.subr.bf16.mxu0 %v733
    %1000 = vmatpush1.bf16.msra.mxu0 %v732
    %1001 = vmatprep.subr.bf16.mxu0 %v735
    %1002 = vmatpush1.bf16.msra.mxu0 %v734
    %1003 = vmatprep.subr.bf16.mxu0 %v737
    %1004 = vmatpush1.bf16.msra.mxu0 %v736
    %1005 = vmatprep.subr.bf16.mxu0 %v739
    %1006 = vmatpush1.bf16.msra.mxu0 %v738
    %1007 = vmatprep.subr.bf16.mxu0 %v741
    %1008 = vmatpush1.bf16.msra.mxu0 %v740
    %1009 = vmatprep.mubr.bf16.mxu0 %v281
    %1010 = vmatmul.mubr.bf16.gmra.mrb[0].mxu0 %v280
    %v1011 = vpop.f32.mrb[0].mxu0
    %v1012 = vadd.f32 %v969, %v1011
    %v1013 = vpop.f32.mrb[0].mxu0
    %v1014 = vadd.f32 %v971, %v1013
    %v1015 = vpop.f32.mrb[0].mxu0
    %v1016 = vadd.f32 %v973, %v1015
    %v1017 = vpop.f32.mrb[0].mxu0
    %v1018 = vadd.f32 %v975, %v1017
    %1019 = vdwg.mxu0
    %1020 = vmatprep.subr.bf16.mxu0 %v743
    %1021 = vmatpush1.bf16.msra.mxu0 %v742
    %1022 = vmatprep.subr.bf16.mxu0 %v745
    %1023 = vmatpush1.bf16.msra.mxu0 %v744
    %1024 = vmatprep.subr.bf16.mxu0 %v747
    %1025 = vmatpush1.bf16.msra.mxu0 %v746
    %1026 = vmatprep.subr.bf16.mxu0 %v749
    %1027 = vmatpush1.bf16.msra.mxu0 %v748
    %1028 = vmatprep.subr.bf16.mxu0 %v751
    %1029 = vmatpush1.bf16.msra.mxu0 %v750
    %1030 = vmatprep.subr.bf16.mxu0 %v753
    %1031 = vmatpush1.bf16.msra.mxu0 %v752
    %1032 = vmatprep.subr.bf16.mxu0 %v755
    %1033 = vmatpush1.bf16.msra.mxu0 %v754
    %1034 = vmatprep.subr.bf16.mxu0 %v757
    %1035 = vmatpush1.bf16.msra.mxu0 %v756
    %1036 = vmatprep.subr.bf16.mxu0 %v759
    %1037 = vmatpush1.bf16.msra.mxu0 %v758
    %1038 = vmatprep.subr.bf16.mxu0 %v761
    %1039 = vmatpush1.bf16.msra.mxu0 %v760
    %1040 = vmatprep.subr.bf16.mxu0 %v763
    %1041 = vmatpush1.bf16.msra.mxu0 %v762
    %1042 = vmatprep.subr.bf16.mxu0 %v765
    %1043 = vmatpush1.bf16.msra.mxu0 %v764
    %1044 = vmatprep.subr.bf16.mxu0 %v767
    %1045 = vmatpush1.bf16.msra.mxu0 %v766
    %1046 = vmatprep.subr.bf16.mxu0 %v769
    %1047 = vmatpush1.bf16.msra.mxu0 %v768
    %1048 = vmatprep.subr.bf16.mxu0 %v771
    %1049 = vmatpush1.bf16.msra.mxu0 %v770
    %1050 = vmatprep.subr.bf16.mxu0 %v773
    %1051 = vmatpush1.bf16.msra.mxu0 %v772
    %1052 = vmatprep.mubr.bf16.mxu0 %v283
    %1053 = vmatmul.mubr.bf16.gmra.mrb[0].mxu0 %v282
    %v1054 = vpop.f32.mrb[0].mxu0
    %v1055 = vadd.f32 %v1012, %v1054
    %v1056 = vpop.f32.mrb[0].mxu0
    %v1057 = vadd.f32 %v1014, %v1056
    %v1058 = vpop.f32.mrb[0].mxu0
    %v1059 = vadd.f32 %v1016, %v1058
    %v1060 = vpop.f32.mrb[0].mxu0
    %v1061 = vadd.f32 %v1018, %v1060
    %1062 = vdwg.mxu0
    %1063 = vmatprep.subr.bf16.mxu0 %v775
    %1064 = vmatpush1.bf16.msra.mxu0 %v774
    %1065 = vmatprep.subr.bf16.mxu0 %v777
    %1066 = vmatpush1.bf16.msra.mxu0 %v776
    %1067 = vmatprep.subr.bf16.mxu0 %v779
    %1068 = vmatpush1.bf16.msra.mxu0 %v778
    %1069 = vmatprep.subr.bf16.mxu0 %v781
    %1070 = vmatpush1.bf16.msra.mxu0 %v780
    %1071 = vmatprep.subr.bf16.mxu0 %v783
    %1072 = vmatpush1.bf16.msra.mxu0 %v782
    %1073 = vmatprep.subr.bf16.mxu0 %v785
    %1074 = vmatpush1.bf16.msra.mxu0 %v784
    %1075 = vmatprep.subr.bf16.mxu0 %v787
    %1076 = vmatpush1.bf16.msra.mxu0 %v786
    %1077 = vmatprep.subr.bf16.mxu0 %v789
    %1078 = vmatpush1.bf16.msra.mxu0 %v788
    %1079 = vmatprep.subr.bf16.mxu0 %v791
    %1080 = vmatpush1.bf16.msra.mxu0 %v790
    %1081 = vmatprep.subr.bf16.mxu0 %v793
    %1082 = vmatpush1.bf16.msra.mxu0 %v792
    %1083 = vmatprep.subr.bf16.mxu0 %v795
    %1084 = vmatpush1.bf16.msra.mxu0 %v794
    %1085 = vmatprep.subr.bf16.mxu0 %v797
    %1086 = vmatpush1.bf16.msra.mxu0 %v796
    %1087 = vmatprep.subr.bf16.mxu0 %v799
    %1088 = vmatpush1.bf16.msra.mxu0 %v798
    %1089 = vmatprep.subr.bf16.mxu0 %v801
    %1090 = vmatpush1.bf16.msra.mxu0 %v800
    %1091 = vmatprep.subr.bf16.mxu0 %v803
    %1092 = vmatpush1.bf16.msra.mxu0 %v802
    %1093 = vmatprep.subr.bf16.mxu0 %v805
    %1094 = vmatpush1.bf16.msra.mxu0 %v804
    %1095 = vmatprep.mubr.bf16.mxu0 %v285
    %1096 = vmatmul.mubr.bf16.gmra.mrb[0].mxu0 %v284
    %v1097 = vpop.f32.mrb[0].mxu0
    %v1098 = vadd.f32 %v1055, %v1097
    %v1099 = vpop.f32.mrb[0].mxu0
    %v1100 = vadd.f32 %v1057, %v1099
    %v1101 = vpop.f32.mrb[0].mxu0
    %v1102 = vadd.f32 %v1059, %v1101
    %v1103 = vpop.f32.mrb[0].mxu0
    %v1104 = vadd.f32 %v1061, %v1103
    %1105 = vdwg.mxu0
    %v1106 = vmax.f32 %v1098, 0.0
    %v1107 = vmax.f32 %v1100, 0.0
    %v1108 = vmax.f32 %v1102, 0.0
    %v1109 = vmax.f32 %v1104, 0.0
    %v1110 = vpack.c.bf16 %v1108, %v1106
    %v1111 = vpack.c.bf16 %v1109, %v1107
    %v1112 = vld [vmem:[%s3] sm:$0xff]
    %v1113 = vld [vmem:[%s3 + $0x8] sm:$0xff]
    %v1114 = vld [vmem:[%s3 + $0x10] sm:$0xff]
    %v1115 = vld [vmem:[%s3 + $0x18] sm:$0xff]
    %v1116 = vld [vmem:[%s3 + $0x20] sm:$0xff]
    %v1117 = vld [vmem:[%s3 + $0x28] sm:$0xff]
    %v1118 = vld [vmem:[%s3 + $0x30] sm:$0xff]
    %v1119 = vld [vmem:[%s3 + $0x38] sm:$0xff]
    %v1120 = vld [vmem:[%s3 + $0x40] sm:$0xff]
    %v1121 = vld [vmem:[%s3 + $0x48] sm:$0xff]
    %v1122 = vld [vmem:[%s3 + $0x50] sm:$0xff]
    %v1123 = vld [vmem:[%s3 + $0x58] sm:$0xff]
    %v1124 = vld [vmem:[%s3 + $0x60] sm:$0xff]
    %v1125 = vld [vmem:[%s3 + $0x68] sm:$0xff]
    %v1126 = vld [vmem:[%s3 + $0x70] sm:$0xff]
    %v1127 = vld [vmem:[%s3 + $0x78] sm:$0xff]
    %v1128 = vld [vmem:[%s3 + $0x80] sm:$0xff]
    %v1129 = vld [vmem:[%s3 + $0x88] sm:$0xff]
    %v1130 = vld [vmem:[%s3 + $0x90] sm:$0xff]
    %v1131 = vld [vmem:[%s3 + $0x98] sm:$0xff]
    %v1132 = vld [vmem:[%s3 + $0xa0] sm:$0xff]
    %v1133 = vld [vmem:[%s3 + $0xa8] sm:$0xff]
    %v1134 = vld [vmem:[%s3 + $0xb0] sm:$0xff]
    %v1135 = vld [vmem:[%s3 + $0xb8] sm:$0xff]
    %v1136 = vld [vmem:[%s3 + $0xc0] sm:$0xff]
    %v1137 = vld [vmem:[%s3 + $0xc8] sm:$0xff]
    %v1138 = vld [vmem:[%s3 + $0xd0] sm:$0xff]
    %v1139 = vld [vmem:[%s3 + $0xd8] sm:$0xff]
    %v1140 = vld [vmem:[%s3 + $0xe0] sm:$0xff]
    %v1141 = vld [vmem:[%s3 + $0xe8] sm:$0xff]
    %v1142 = vld [vmem:[%s3 + $0xf0] sm:$0xff]
    %v1143 = vld [vmem:[%s3 + $0xf8] sm:$0xff]
    %v1144 = vld [vmem:[%s4] sm:$0x3]
    %v1146 = vlaneseq
    %v1147 = vshrl.u32 %v1146, 7
    %v1148 = vsub.s32 0, %v1147
    %v1149 = vrot.slane %v1144, %v1148
    %v1150 = vlaneseq
    %v1151 = vshrl.u32 %v1150, 7
    %v1152 = vsub.s32 1, %v1151
    %v1153 = vrot.slane %v1144, %v1152
    %v1188 = vunpack.c.l.b16 %v1112
    %v1189 = vunpack.c.h.b16 %v1112
    %v1190 = vunpack.c.l.b16 %v1113
    %v1191 = vunpack.c.h.b16 %v1113
    %v1192 = vunpack.c.l.b16 %v1114
    %v1193 = vunpack.c.h.b16 %v1114
    %v1194 = vunpack.c.l.b16 %v1115
    %v1195 = vunpack.c.h.b16 %v1115
    %v1196 = vunpack.c.l.b16 %v1116
    %v1197 = vunpack.c.h.b16 %v1116
    %v1198 = vunpack.c.l.b16 %v1117
    %v1199 = vunpack.c.h.b16 %v1117
    %v1200 = vunpack.c.l.b16 %v1118
    %v1201 = vunpack.c.h.b16 %v1118
    %v1202 = vunpack.c.l.b16 %v1119
    %v1203 = vunpack.c.h.b16 %v1119
    %v1204 = vunpack.c.l.b16 %v1120
    %v1205 = vunpack.c.h.b16 %v1120
    %v1206 = vunpack.c.l.b16 %v1121
    %v1207 = vunpack.c.h.b16 %v1121
    %v1208 = vunpack.c.l.b16 %v1122
    %v1209 = vunpack.c.h.b16 %v1122
    %v1210 = vunpack.c.l.b16 %v1123
    %v1211 = vunpack.c.h.b16 %v1123
    %v1212 = vunpack.c.l.b16 %v1124
    %v1213 = vunpack.c.h.b16 %v1124
    %v1214 = vunpack.c.l.b16 %v1125
    %v1215 = vunpack.c.h.b16 %v1125
    %v1216 = vunpack.c.l.b16 %v1126
    %v1217 = vunpack.c.h.b16 %v1126
    %v1218 = vunpack.c.l.b16 %v1127
    %v1219 = vunpack.c.h.b16 %v1127
    %v1220 = vunpack.c.l.b16 %v1128
    %v1221 = vunpack.c.h.b16 %v1128
    %v1222 = vunpack.c.l.b16 %v1129
    %v1223 = vunpack.c.h.b16 %v1129
    %v1224 = vunpack.c.l.b16 %v1130
    %v1225 = vunpack.c.h.b16 %v1130
    %v1226 = vunpack.c.l.b16 %v1131
    %v1227 = vunpack.c.h.b16 %v1131
    %v1228 = vunpack.c.l.b16 %v1132
    %v1229 = vunpack.c.h.b16 %v1132
    %v1230 = vunpack.c.l.b16 %v1133
    %v1231 = vunpack.c.h.b16 %v1133
    %v1232 = vunpack.c.l.b16 %v1134
    %v1233 = vunpack.c.h.b16 %v1134
    %v1234 = vunpack.c.l.b16 %v1135
    %v1235 = vunpack.c.h.b16 %v1135
    %v1236 = vunpack.c.l.b16 %v1136
    %v1237 = vunpack.c.h.b16 %v1136
    %v1238 = vunpack.c.l.b16 %v1137
    %v1239 = vunpack.c.h.b16 %v1137
    %v1240 = vunpack.c.l.b16 %v1138
    %v1241 = vunpack.c.h.b16 %v1138
    %v1242 = vunpack.c.l.b16 %v1139
    %v1243 = vunpack.c.h.b16 %v1139
    %v1244 = vunpack.c.l.b16 %v1140
    %v1245 = vunpack.c.h.b16 %v1140
    %v1246 = vunpack.c.l.b16 %v1141
    %v1247 = vunpack.c.h.b16 %v1141
    %v1248 = vunpack.c.l.b16 %v1142
    %v1249 = vunpack.c.h.b16 %v1142
    %v1250 = vunpack.c.l.b16 %v1143
    %v1251 = vunpack.c.h.b16 %v1143
    %v1252 = vpack.c.b16 %v1190, %v1188
    %v1253 = vpack.c.b16 %v1191, %v1189
    %v1254 = vpack.c.b16 %v1194, %v1192
    %v1255 = vpack.c.b16 %v1195, %v1193
    %v1256 = vpack.c.b16 %v1198, %v1196
    %v1257 = vpack.c.b16 %v1199, %v1197
    %v1258 = vpack.c.b16 %v1202, %v1200
    %v1259 = vpack.c.b16 %v1203, %v1201
    %v1260 = vpack.c.b16 %v1206, %v1204
    %v1261 = vpack.c.b16 %v1207, %v1205
    %v1262 = vpack.c.b16 %v1210, %v1208
    %v1263 = vpack.c.b16 %v1211, %v1209
    %v1264 = vpack.c.b16 %v1214, %v1212
    %v1265 = vpack.c.b16 %v1215, %v1213
    %v1266 = vpack.c.b16 %v1218, %v1216
    %v1267 = vpack.c.b16 %v1219, %v1217
    %v1268 = vpack.c.b16 %v1222, %v1220
    %v1269 = vpack.c.b16 %v1223, %v1221
    %v1270 = vpack.c.b16 %v1226, %v1224
    %v1271 = vpack.c.b16 %v1227, %v1225
    %v1272 = vpack.c.b16 %v1230, %v1228
    %v1273 = vpack.c.b16 %v1231, %v1229
    %v1274 = vpack.c.b16 %v1234, %v1232
    %v1275 = vpack.c.b16 %v1235, %v1233
    %v1276 = vpack.c.b16 %v1238, %v1236
    %v1277 = vpack.c.b16 %v1239, %v1237
    %v1278 = vpack.c.b16 %v1242, %v1240
    %v1279 = vpack.c.b16 %v1243, %v1241
    %v1280 = vpack.c.b16 %v1246, %v1244
    %v1281 = vpack.c.b16 %v1247, %v1245
    %v1282 = vpack.c.b16 %v1250, %v1248
    %v1283 = vpack.c.b16 %v1251, %v1249
    %1316 = vmatprep.subr.bf16.mxu0 %v1253
    %1317 = vmatpush1.bf16.msra.mxu0 %v1252
    %1318 = vmatprep.subr.bf16.mxu0 %v1255
    %1319 = vmatpush1.bf16.msra.mxu0 %v1254
    %1320 = vmatprep.subr.bf16.mxu0 %v1257
    %1321 = vmatpush1.bf16.msra.mxu0 %v1256
    %1322 = vmatprep.subr.bf16.mxu0 %v1259
    %1323 = vmatpush1.bf16.msra.mxu0 %v1258
    %1324 = vmatprep.subr.bf16.mxu0 %v1261
    %1325 = vmatpush1.bf16.msra.mxu0 %v1260
    %1326 = vmatprep.subr.bf16.mxu0 %v1263
    %1327 = vmatpush1.bf16.msra.mxu0 %v1262
    %1328 = vmatprep.subr.bf16.mxu0 %v1265
    %1329 = vmatpush1.bf16.msra.mxu0 %v1264
    %1330 = vmatprep.subr.bf16.mxu0 %v1267
    %1331 = vmatpush1.bf16.msra.mxu0 %v1266
    %1332 = vmatprep.subr.bf16.mxu0 %v1269
    %1333 = vmatpush1.bf16.msra.mxu0 %v1268
    %1334 = vmatprep.subr.bf16.mxu0 %v1271
    %1335 = vmatpush1.bf16.msra.mxu0 %v1270
    %1336 = vmatprep.subr.bf16.mxu0 %v1273
    %1337 = vmatpush1.bf16.msra.mxu0 %v1272
    %1338 = vmatprep.subr.bf16.mxu0 %v1275
    %1339 = vmatpush1.bf16.msra.mxu0 %v1274
    %1340 = vmatprep.subr.bf16.mxu0 %v1277
    %1341 = vmatpush1.bf16.msra.mxu0 %v1276
    %1342 = vmatprep.subr.bf16.mxu0 %v1279
    %1343 = vmatpush1.bf16.msra.mxu0 %v1278
    %1344 = vmatprep.subr.bf16.mxu0 %v1281
    %1345 = vmatpush1.bf16.msra.mxu0 %v1280
    %1346 = vmatprep.subr.bf16.mxu0 %v1283
    %1347 = vmatpush1.bf16.msra.mxu0 %v1282
    %1348 = vmatprep.mubr.bf16.mxu0 %v1111
    %1349 = vmatmul.mubr.bf16.gmra.mrb[0].mxu0 %v1110
    %v1350 = vpop.f32.mrb[0].mxu0
    %v1351 = vadd.f32 %v1149, %v1350
    %v1352 = vpop.f32.mrb[0].mxu0
    %v1353 = vadd.f32 %v1153, %v1352
    %v1354 = vpop.f32.mrb[0].mxu0
    %v1355 = vadd.f32 %v1149, %v1354
    %v1356 = vpop.f32.mrb[0].mxu0
    %v1357 = vadd.f32 %v1153, %v1356
    %1358 = vdwg.mxu0
    %v1359 = vmax.f32 %v1351, 0.0
    %v1360 = vmax.f32 %v1353, 0.0
    %v1361 = vmax.f32 %v1355, 0.0
    %v1362 = vmax.f32 %v1357, 0.0
    %v1363 = vpack.c.bf16 %v1361, %v1359
    %v1364 = vpack.c.bf16 %v1362, %v1360
    %v1365 = vld [vmem:[%s5] sm:$0xff]
    %v1366 = vld [vmem:[%s5 + $0x8] sm:$0xff]
    %v1367 = vld [vmem:[%s5 + $0x10] sm:$0xff]
    %v1368 = vld [vmem:[%s5 + $0x18] sm:$0xff]
    %v1369 = vld [vmem:[%s5 + $0x20] sm:$0xff]
    %v1370 = vld [vmem:[%s5 + $0x28] sm:$0xff]
    %v1371 = vld [vmem:[%s5 + $0x30] sm:$0xff]
    %v1372 = vld [vmem:[%s5 + $0x38] sm:$0xff]
    %v1373 = vld [vmem:[%s5 + $0x40] sm:$0xff]
    %v1374 = vld [vmem:[%s5 + $0x48] sm:$0xff]
    %v1375 = vld [vmem:[%s5 + $0x50] sm:$0xff]
    %v1376 = vld [vmem:[%s5 + $0x58] sm:$0xff]
    %v1377 = vld [vmem:[%s5 + $0x60] sm:$0xff]
    %v1378 = vld [vmem:[%s5 + $0x68] sm:$0xff]
    %v1379 = vld [vmem:[%s5 + $0x70] sm:$0xff]
    %v1380 = vld [vmem:[%s5 + $0x78] sm:$0xff]
    %v1381 = vld [vmem:[%s5 + $0x80] sm:$0xff]
    %v1382 = vld [vmem:[%s5 + $0x88] sm:$0xff]
    %v1383 = vld [vmem:[%s5 + $0x90] sm:$0xff]
    %v1384 = vld [vmem:[%s5 + $0x98] sm:$0xff]
    %v1385 = vld [vmem:[%s5 + $0xa0] sm:$0xff]
    %v1386 = vld [vmem:[%s5 + $0xa8] sm:$0xff]
    %v1387 = vld [vmem:[%s5 + $0xb0] sm:$0xff]
    %v1388 = vld [vmem:[%s5 + $0xb8] sm:$0xff]
    %v1389 = vld [vmem:[%s5 + $0xc0] sm:$0xff]
    %v1390 = vld [vmem:[%s5 + $0xc8] sm:$0xff]
    %v1391 = vld [vmem:[%s5 + $0xd0] sm:$0xff]
    %v1392 = vld [vmem:[%s5 + $0xd8] sm:$0xff]
    %v1393 = vld [vmem:[%s5 + $0xe0] sm:$0xff]
    %v1394 = vld [vmem:[%s5 + $0xe8] sm:$0xff]
    %v1395 = vld [vmem:[%s5 + $0xf0] sm:$0xff]
    %v1396 = vld [vmem:[%s5 + $0xf8] sm:$0xff]
    %v1397 = vld [vmem:[#allocation4] sm:$0x3]
    %v1399 = vlaneseq
    %v1400 = vshrl.u32 %v1399, 7
    %v1401 = vsub.s32 0, %v1400
    %v1402 = vrot.slane %v1397, %v1401
    %v1403 = vlaneseq
    %v1404 = vshrl.u32 %v1403, 7
    %v1405 = vsub.s32 1, %v1404
    %v1406 = vrot.slane %v1397, %v1405
    %v1441 = vunpack.c.l.b16 %v1365
    %v1442 = vunpack.c.h.b16 %v1365
    %v1443 = vunpack.c.l.b16 %v1366
    %v1444 = vunpack.c.h.b16 %v1366
    %v1445 = vunpack.c.l.b16 %v1367
    %v1446 = vunpack.c.h.b16 %v1367
    %v1447 = vunpack.c.l.b16 %v1368
    %v1448 = vunpack.c.h.b16 %v1368
    %v1449 = vunpack.c.l.b16 %v1369
    %v1450 = vunpack.c.h.b16 %v1369
    %v1451 = vunpack.c.l.b16 %v1370
    %v1452 = vunpack.c.h.b16 %v1370
    %v1453 = vunpack.c.l.b16 %v1371
    %v1454 = vunpack.c.h.b16 %v1371
    %v1455 = vunpack.c.l.b16 %v1372
    %v1456 = vunpack.c.h.b16 %v1372
    %v1457 = vunpack.c.l.b16 %v1373
    %v1458 = vunpack.c.h.b16 %v1373
    %v1459 = vunpack.c.l.b16 %v1374
    %v1460 = vunpack.c.h.b16 %v1374
    %v1461 = vunpack.c.l.b16 %v1375
    %v1462 = vunpack.c.h.b16 %v1375
    %v1463 = vunpack.c.l.b16 %v1376
    %v1464 = vunpack.c.h.b16 %v1376
    %v1465 = vunpack.c.l.b16 %v1377
    %v1466 = vunpack.c.h.b16 %v1377
    %v1467 = vunpack.c.l.b16 %v1378
    %v1468 = vunpack.c.h.b16 %v1378
    %v1469 = vunpack.c.l.b16 %v1379
    %v1470 = vunpack.c.h.b16 %v1379
    %v1471 = vunpack.c.l.b16 %v1380
    %v1472 = vunpack.c.h.b16 %v1380
    %v1473 = vunpack.c.l.b16 %v1381
    %v1474 = vunpack.c.h.b16 %v1381
    %v1475 = vunpack.c.l.b16 %v1382
    %v1476 = vunpack.c.h.b16 %v1382
    %v1477 = vunpack.c.l.b16 %v1383
    %v1478 = vunpack.c.h.b16 %v1383
    %v1479 = vunpack.c.l.b16 %v1384
    %v1480 = vunpack.c.h.b16 %v1384
    %v1481 = vunpack.c.l.b16 %v1385
    %v1482 = vunpack.c.h.b16 %v1385
    %v1483 = vunpack.c.l.b16 %v1386
    %v1484 = vunpack.c.h.b16 %v1386
    %v1485 = vunpack.c.l.b16 %v1387
    %v1486 = vunpack.c.h.b16 %v1387
    %v1487 = vunpack.c.l.b16 %v1388
    %v1488 = vunpack.c.h.b16 %v1388
    %v1489 = vunpack.c.l.b16 %v1389
    %v1490 = vunpack.c.h.b16 %v1389
    %v1491 = vunpack.c.l.b16 %v1390
    %v1492 = vunpack.c.h.b16 %v1390
    %v1493 = vunpack.c.l.b16 %v1391
    %v1494 = vunpack.c.h.b16 %v1391
    %v1495 = vunpack.c.l.b16 %v1392
    %v1496 = vunpack.c.h.b16 %v1392
    %v1497 = vunpack.c.l.b16 %v1393
    %v1498 = vunpack.c.h.b16 %v1393
    %v1499 = vunpack.c.l.b16 %v1394
    %v1500 = vunpack.c.h.b16 %v1394
    %v1501 = vunpack.c.l.b16 %v1395
    %v1502 = vunpack.c.h.b16 %v1395
    %v1503 = vunpack.c.l.b16 %v1396
    %v1504 = vunpack.c.h.b16 %v1396
    %v1505 = vpack.c.b16 %v1443, %v1441
    %v1506 = vpack.c.b16 %v1444, %v1442
    %v1507 = vpack.c.b16 %v1447, %v1445
    %v1508 = vpack.c.b16 %v1448, %v1446
    %v1509 = vpack.c.b16 %v1451, %v1449
    %v1510 = vpack.c.b16 %v1452, %v1450
    %v1511 = vpack.c.b16 %v1455, %v1453
    %v1512 = vpack.c.b16 %v1456, %v1454
    %v1513 = vpack.c.b16 %v1459, %v1457
    %v1514 = vpack.c.b16 %v1460, %v1458
    %v1515 = vpack.c.b16 %v1463, %v1461
    %v1516 = vpack.c.b16 %v1464, %v1462
    %v1517 = vpack.c.b16 %v1467, %v1465
    %v1518 = vpack.c.b16 %v1468, %v1466
    %v1519 = vpack.c.b16 %v1471, %v1469
    %v1520 = vpack.c.b16 %v1472, %v1470
    %v1521 = vpack.c.b16 %v1475, %v1473
    %v1522 = vpack.c.b16 %v1476, %v1474
    %v1523 = vpack.c.b16 %v1479, %v1477
    %v1524 = vpack.c.b16 %v1480, %v1478
    %v1525 = vpack.c.b16 %v1483, %v1481
    %v1526 = vpack.c.b16 %v1484, %v1482
    %v1527 = vpack.c.b16 %v1487, %v1485
    %v1528 = vpack.c.b16 %v1488, %v1486
    %v1529 = vpack.c.b16 %v1491, %v1489
    %v1530 = vpack.c.b16 %v1492, %v1490
    %v1531 = vpack.c.b16 %v1495, %v1493
    %v1532 = vpack.c.b16 %v1496, %v1494
    %v1533 = vpack.c.b16 %v1499, %v1497
    %v1534 = vpack.c.b16 %v1500, %v1498
    %v1535 = vpack.c.b16 %v1503, %v1501
    %v1536 = vpack.c.b16 %v1504, %v1502
    %1569 = vmatprep.subr.bf16.mxu0 %v1506
    %1570 = vmatpush1.bf16.msra.mxu0 %v1505
    %1571 = vmatprep.subr.bf16.mxu0 %v1508
    %1572 = vmatpush1.bf16.msra.mxu0 %v1507
    %1573 = vmatprep.subr.bf16.mxu0 %v1510
    %1574 = vmatpush1.bf16.msra.mxu0 %v1509
    %1575 = vmatprep.subr.bf16.mxu0 %v1512
    %1576 = vmatpush1.bf16.msra.mxu0 %v1511
    %1577 = vmatprep.subr.bf16.mxu0 %v1514
    %1578 = vmatpush1.bf16.msra.mxu0 %v1513
    %1579 = vmatprep.subr.bf16.mxu0 %v1516
    %1580 = vmatpush1.bf16.msra.mxu0 %v1515
    %1581 = vmatprep.subr.bf16.mxu0 %v1518
    %1582 = vmatpush1.bf16.msra.mxu0 %v1517
    %1583 = vmatprep.subr.bf16.mxu0 %v1520
    %1584 = vmatpush1.bf16.msra.mxu0 %v1519
    %1585 = vmatprep.subr.bf16.mxu0 %v1522
    %1586 = vmatpush1.bf16.msra.mxu0 %v1521
    %1587 = vmatprep.subr.bf16.mxu0 %v1524
    %1588 = vmatpush1.bf16.msra.mxu0 %v1523
    %1589 = vmatprep.subr.bf16.mxu0 %v1526
    %1590 = vmatpush1.bf16.msra.mxu0 %v1525
    %1591 = vmatprep.subr.bf16.mxu0 %v1528
    %1592 = vmatpush1.bf16.msra.mxu0 %v1527
    %1593 = vmatprep.subr.bf16.mxu0 %v1530
    %1594 = vmatpush1.bf16.msra.mxu0 %v1529
    %1595 = vmatprep.subr.bf16.mxu0 %v1532
    %1596 = vmatpush1.bf16.msra.mxu0 %v1531
    %1597 = vmatprep.subr.bf16.mxu0 %v1534
    %1598 = vmatpush1.bf16.msra.mxu0 %v1533
    %1599 = vmatprep.subr.bf16.mxu0 %v1536
    %1600 = vmatpush1.bf16.msra.mxu0 %v1535
    %1601 = vmatprep.mubr.bf16.mxu0 %v1364
    %1602 = vmatmul.mubr.bf16.gmra.mrb[0].mxu0 %v1363
    %v1603 = vpop.f32.mrb[0].mxu0
    %v1604 = vadd.f32 %v1402, %v1603
    %v1605 = vpop.f32.mrb[0].mxu0
    %v1606 = vadd.f32 %v1406, %v1605
    %v1607 = vpop.f32.mrb[0].mxu0
    %v1608 = vadd.f32 %v1402, %v1607
    %v1609 = vpop.f32.mrb[0].mxu0
    %v1610 = vadd.f32 %v1406, %v1609
    %1611 = vdwg.mxu0
    %1612 = vst [vmem:[%s13] sm:$0xff] %v1604
    %1613 = vst [vmem:[%s13 + $0x8] sm:$0xff] %v1606
    %1614 = vst [vmem:[%s13 + $0x10] sm:$0xff] %v1608
    %1615 = vst [vmem:[%s13 + $0x18] sm:$0xff] %v1610
    %v1616 = vpack.c.bf16 %v1608, %v1604
    %v1617 = vpack.c.bf16 %v1610, %v1606
    %v1618 = vld [vmem:[#allocation6] sm:$0xff]
    %v1619 = vld [vmem:[#allocation6 + $0x8] sm:$0xff]
    %v1620 = vld [vmem:[#allocation6 + $0x10] sm:$0xff]
    %v1621 = vld [vmem:[#allocation6 + $0x18] sm:$0xff]
    %v1622 = vld [vmem:[#allocation6 + $0x20] sm:$0xff]
    %v1623 = vld [vmem:[#allocation6 + $0x28] sm:$0xff]
    %v1624 = vld [vmem:[#allocation6 + $0x30] sm:$0xff]
    %v1625 = vld [vmem:[#allocation6 + $0x38] sm:$0xff]
    %v1626 = vld [vmem:[#allocation6 + $0x40] sm:$0xff]
    %v1627 = vld [vmem:[#allocation6 + $0x48] sm:$0xff]
    %v1628 = vld [vmem:[#allocation6 + $0x50] sm:$0xff]
    %v1629 = vld [vmem:[#allocation6 + $0x58] sm:$0xff]
    %v1630 = vld [vmem:[#allocation6 + $0x60] sm:$0xff]
    %v1631 = vld [vmem:[#allocation6 + $0x68] sm:$0xff]
    %v1632 = vld [vmem:[#allocation6 + $0x70] sm:$0xff]
    %v1633 = vld [vmem:[#allocation6 + $0x78] sm:$0xff]
    %v1634 = vld [vmem:[#allocation6 + $0x80] sm:$0xff]
    %v1635 = vld [vmem:[#allocation6 + $0x88] sm:$0xff]
    %v1636 = vld [vmem:[#allocation6 + $0x90] sm:$0xff]
    %v1637 = vld [vmem:[#allocation6 + $0x98] sm:$0xff]
    %v1638 = vld [vmem:[#allocation6 + $0xa0] sm:$0xff]
    %v1639 = vld [vmem:[#allocation6 + $0xa8] sm:$0xff]
    %v1640 = vld [vmem:[#allocation6 + $0xb0] sm:$0xff]
    %v1641 = vld [vmem:[#allocation6 + $0xb8] sm:$0xff]
    %v1642 = vld [vmem:[#allocation6 + $0xc0] sm:$0xff]
    %v1643 = vld [vmem:[#allocation6 + $0xc8] sm:$0xff]
    %v1644 = vld [vmem:[#allocation6 + $0xd0] sm:$0xff]
    %v1645 = vld [vmem:[#allocation6 + $0xd8] sm:$0xff]
    %v1646 = vld [vmem:[#allocation6 + $0xe0] sm:$0xff]
    %v1647 = vld [vmem:[#allocation6 + $0xe8] sm:$0xff]
    %v1648 = vld [vmem:[#allocation6 + $0xf0] sm:$0xff]
    %v1649 = vld [vmem:[#allocation6 + $0xf8] sm:$0xff]
    %v1682 = vunpack.c.l.b16 %v1618
    %v1683 = vunpack.c.h.b16 %v1618
    %v1684 = vunpack.c.l.b16 %v1619
    %v1685 = vunpack.c.h.b16 %v1619
    %v1686 = vunpack.c.l.b16 %v1620
    %v1687 = vunpack.c.h.b16 %v1620
    %v1688 = vunpack.c.l.b16 %v1621
    %v1689 = vunpack.c.h.b16 %v1621
    %v1690 = vunpack.c.l.b16 %v1622
    %v1691 = vunpack.c.h.b16 %v1622
    %v1692 = vunpack.c.l.b16 %v1623
    %v1693 = vunpack.c.h.b16 %v1623
    %v1694 = vunpack.c.l.b16 %v1624
    %v1695 = vunpack.c.h.b16 %v1624
    %v1696 = vunpack.c.l.b16 %v1625
    %v1697 = vunpack.c.h.b16 %v1625
    %v1698 = vunpack.c.l.b16 %v1626
    %v1699 = vunpack.c.h.b16 %v1626
    %v1700 = vunpack.c.l.b16 %v1627
    %v1701 = vunpack.c.h.b16 %v1627
    %v1702 = vunpack.c.l.b16 %v1628
    %v1703 = vunpack.c.h.b16 %v1628
    %v1704 = vunpack.c.l.b16 %v1629
    %v1705 = vunpack.c.h.b16 %v1629
    %v1706 = vunpack.c.l.b16 %v1630
    %v1707 = vunpack.c.h.b16 %v1630
    %v1708 = vunpack.c.l.b16 %v1631
    %v1709 = vunpack.c.h.b16 %v1631
    %v1710 = vunpack.c.l.b16 %v1632
    %v1711 = vunpack.c.h.b16 %v1632
    %v1712 = vunpack.c.l.b16 %v1633
    %v1713 = vunpack.c.h.b16 %v1633
    %v1714 = vunpack.c.l.b16 %v1634
    %v1715 = vunpack.c.h.b16 %v1634
    %v1716 = vunpack.c.l.b16 %v1635
    %v1717 = vunpack.c.h.b16 %v1635
    %v1718 = vunpack.c.l.b16 %v1636
    %v1719 = vunpack.c.h.b16 %v1636
    %v1720 = vunpack.c.l.b16 %v1637
    %v1721 = vunpack.c.h.b16 %v1637
    %v1722 = vunpack.c.l.b16 %v1638
    %v1723 = vunpack.c.h.b16 %v1638
    %v1724 = vunpack.c.l.b16 %v1639
    %v1725 = vunpack.c.h.b16 %v1639
    %v1726 = vunpack.c.l.b16 %v1640
    %v1727 = vunpack.c.h.b16 %v1640
    %v1728 = vunpack.c.l.b16 %v1641
    %v1729 = vunpack.c.h.b16 %v1641
    %v1730 = vunpack.c.l.b16 %v1642
    %v1731 = vunpack.c.h.b16 %v1642
    %v1732 = vunpack.c.l.b16 %v1643
    %v1733 = vunpack.c.h.b16 %v1643
    %v1734 = vunpack.c.l.b16 %v1644
    %v1735 = vunpack.c.h.b16 %v1644
    %v1736 = vunpack.c.l.b16 %v1645
    %v1737 = vunpack.c.h.b16 %v1645
    %v1738 = vunpack.c.l.b16 %v1646
    %v1739 = vunpack.c.h.b16 %v1646
    %v1740 = vunpack.c.l.b16 %v1647
    %v1741 = vunpack.c.h.b16 %v1647
    %v1742 = vunpack.c.l.b16 %v1648
    %v1743 = vunpack.c.h.b16 %v1648
    %v1744 = vunpack.c.l.b16 %v1649
    %v1745 = vunpack.c.h.b16 %v1649
    %v1746 = vpack.c.b16 %v1684, %v1682
    %v1747 = vpack.c.b16 %v1685, %v1683
    %v1748 = vpack.c.b16 %v1688, %v1686
    %v1749 = vpack.c.b16 %v1689, %v1687
    %v1750 = vpack.c.b16 %v1692, %v1690
    %v1751 = vpack.c.b16 %v1693, %v1691
    %v1752 = vpack.c.b16 %v1696, %v1694
    %v1753 = vpack.c.b16 %v1697, %v1695
    %v1754 = vpack.c.b16 %v1700, %v1698
    %v1755 = vpack.c.b16 %v1701, %v1699
    %v1756 = vpack.c.b16 %v1704, %v1702
    %v1757 = vpack.c.b16 %v1705, %v1703
    %v1758 = vpack.c.b16 %v1708, %v1706
    %v1759 = vpack.c.b16 %v1709, %v1707
    %v1760 = vpack.c.b16 %v1712, %v1710
    %v1761 = vpack.c.b16 %v1713, %v1711
    %v1762 = vpack.c.b16 %v1716, %v1714
    %v1763 = vpack.c.b16 %v1717, %v1715
    %v1764 = vpack.c.b16 %v1720, %v1718
    %v1765 = vpack.c.b16 %v1721, %v1719
    %v1766 = vpack.c.b16 %v1724, %v1722
    %v1767 = vpack.c.b16 %v1725, %v1723
    %v1768 = vpack.c.b16 %v1728, %v1726
    %v1769 = vpack.c.b16 %v1729, %v1727
    %v1770 = vpack.c.b16 %v1732, %v1730
    %v1771 = vpack.c.b16 %v1733, %v1731
    %v1772 = vpack.c.b16 %v1736, %v1734
    %v1773 = vpack.c.b16 %v1737, %v1735
    %v1774 = vpack.c.b16 %v1740, %v1738
    %v1775 = vpack.c.b16 %v1741, %v1739
    %v1776 = vpack.c.b16 %v1744, %v1742
    %v1777 = vpack.c.b16 %v1745, %v1743
    %1810 = vmatprep.subr.bf16.mxu0 %v1747
    %1811 = vmatpush1.bf16.msra.mxu0 %v1746
    %1812 = vmatprep.subr.bf16.mxu0 %v1749
    %1813 = vmatpush1.bf16.msra.mxu0 %v1748
    %1814 = vmatprep.subr.bf16.mxu0 %v1751
    %1815 = vmatpush1.bf16.msra.mxu0 %v1750
    %1816 = vmatprep.subr.bf16.mxu0 %v1753
    %1817 = vmatpush1.bf16.msra.mxu0 %v1752
    %1818 = vmatprep.subr.bf16.mxu0 %v1755
    %1819 = vmatpush1.bf16.msra.mxu0 %v1754
    %1820 = vmatprep.subr.bf16.mxu0 %v1757
    %1821 = vmatpush1.bf16.msra.mxu0 %v1756
    %1822 = vmatprep.subr.bf16.mxu0 %v1759
    %1823 = vmatpush1.bf16.msra.mxu0 %v1758
    %1824 = vmatprep.subr.bf16.mxu0 %v1761
    %1825 = vmatpush1.bf16.msra.mxu0 %v1760
    %1826 = vmatprep.subr.bf16.mxu0 %v1763
    %1827 = vmatpush1.bf16.msra.mxu0 %v1762
    %1828 = vmatprep.subr.bf16.mxu0 %v1765
    %1829 = vmatpush1.bf16.msra.mxu0 %v1764
    %1830 = vmatprep.subr.bf16.mxu0 %v1767
    %1831 = vmatpush1.bf16.msra.mxu0 %v1766
    %1832 = vmatprep.subr.bf16.mxu0 %v1769
    %1833 = vmatpush1.bf16.msra.mxu0 %v1768
    %1834 = vmatprep.subr.bf16.mxu0 %v1771
    %1835 = vmatpush1.bf16.msra.mxu0 %v1770
    %1836 = vmatprep.subr.bf16.mxu0 %v1773
    %1837 = vmatpush1.bf16.msra.mxu0 %v1772
    %1838 = vmatprep.subr.bf16.mxu0 %v1775
    %1839 = vmatpush1.bf16.msra.mxu0 %v1774
    %1840 = vmatprep.subr.bf16.mxu0 %v1777
    %1841 = vmatpush1.bf16.msra.mxu0 %v1776
    %1842 = vmatprep.mubr.bf16.mxu0 %v1617
    %1843 = vmatmul.mubr.bf16.gmra.mrb[0].mxu0 %v1616
    %v1844 = vpop.f32.mrb[0].mxu0
    %v1845 = vadd.f32 0.0, %v1844
    %v1846 = vpop.f32.mrb[0].mxu0
    %v1847 = vadd.f32 0.0, %v1846
    %v1848 = vpop.f32.mrb[0].mxu0
    %v1849 = vadd.f32 0.0, %v1848
    %v1850 = vpop.f32.mrb[0].mxu0
    %v1851 = vadd.f32 0.0, %v1850
    %1852 = vdwg.mxu0
    %v1853 = vld [vmem:[#allocation7] sm:$0x3]
    %v1854 = vld [vmem:[#allocation9] sm:$0x3]
    %v1855 = vlaneseq
    %v1856 = vshrl.u32 %v1855, 7
    %vm1857 = vcmp.lt.s32.totalorder %v1856, 2
    %v1858 = vsel %vm1857, %v1845, 0.0
    %v1859 = vsel %vm1857, %v1847, 0.0
    %v1860 = vrot.slane %v1858, 4
    %v1861 = vadd.f32 %v1858, %v1860
    %v1862 = vrot.slane %v1861, 2
    %v1863 = vadd.f32 %v1861, %v1862
    %v1864 = vrot.slane %v1863, 1
    %v1865 = vadd.f32 %v1863, %v1864
    %v1866 = vrot.slane %v1859, 4
    %v1867 = vadd.f32 %v1859, %v1866
    %v1868 = vrot.slane %v1867, 2
    %v1869 = vadd.f32 %v1867, %v1868
    %v1870 = vrot.slane %v1869, 1
    %v1871 = vadd.f32 %v1869, %v1870
    %v1872 = vmul.f32 %v1865, 0.5
    %v1873 = vmul.f32 %v1871, 0.5
    %v1874 = vmul.f32 %v1858, %v1858
    %v1875 = vmul.f32 %v1859, %v1859
    %v1876 = vrot.slane %v1874, 4
    %v1877 = vadd.f32 %v1874, %v1876
    %v1878 = vrot.slane %v1877, 2
    %v1879 = vadd.f32 %v1877, %v1878
    %v1880 = vrot.slane %v1879, 1
    %v1881 = vadd.f32 %v1879, %v1880
    %v1882 = vrot.slane %v1875, 4
    %v1883 = vadd.f32 %v1875, %v1882
    %v1884 = vrot.slane %v1883, 2
    %v1885 = vadd.f32 %v1883, %v1884
    %v1886 = vrot.slane %v1885, 1
    %v1887 = vadd.f32 %v1885, %v1886
    %v1888 = vmul.f32 %v1881, 0.5
    %v1889 = vmul.f32 %v1887, 0.5
    %v1890 = vmul.f32 %v1872, %v1872
    %v1891 = vmul.f32 %v1873, %v1873
    %v1892 = vsub.f32 %v1888, %v1890
    %v1893 = vsub.f32 %v1889, %v1891
    %v1894 = vmax.f32 %v1892, 0.0
    %v1895 = vmax.f32 %v1893, 0.0
    %v1896 = vadd.f32 %v1894, 1e-05
    %v1897 = vadd.f32 %v1895, 1e-05
    %v1898 = vrsqrt.pop %v1896
    %v1899 = vrsqrt.pop %v1897
    %v1902 = vcombine.low %v1898, %v1899
    %v1904 = vunpack.c.l.s4 1966171168
    %v1905 = vunpack.c.0.s8 %v1904
    %v1906 = vlaneseq
    %v1907 = vshrl.u32 %v1906, 7
    %v1908 = vsub.s32 %v1905, %v1907
    %v1909 = vrot.slane %v1902, %v1908
    %v1911 = vunpack.c.l.s4 1966171168
    %v1912 = vunpack.c.0.s8 %v1911
    %v1913 = vlaneseq
    %v1914 = vshrl.u32 %v1913, 7
    %v1915 = vsub.s32 %v1912, %v1914
    %v1916 = vrot.slane %v1909, %v1915
    %v1918 = vmul.f32 %v1853, %v1916
    %v1920 = vlaneseq
    %v1921 = vshrl.u32 %v1920, 7
    %v1922 = vsub.s32 0, %v1921
    %v1923 = vrot.slane %v1918, %v1922
    %v1924 = vlaneseq
    %v1925 = vshrl.u32 %v1924, 7
    %v1926 = vsub.s32 1, %v1925
    %v1927 = vrot.slane %v1918, %v1926
    %v1930 = vmul.f32 %v1872, %v1923
    %v1931 = vmul.f32 %v1873, %v1927
    %v1934 = vcombine.low %v1930, %v1931
    %v1936 = vunpack.c.l.s4 1966171168
    %v1937 = vunpack.c.0.s8 %v1936
    %v1938 = vlaneseq
    %v1939 = vshrl.u32 %v1938, 7
    %v1940 = vsub.s32 %v1937, %v1939
    %v1941 = vrot.slane %v1934, %v1940
    %v1943 = vunpack.c.l.s4 1966171168
    %v1944 = vunpack.c.0.s8 %v1943
    %v1945 = vlaneseq
    %v1946 = vshrl.u32 %v1945, 7
    %v1947 = vsub.s32 %v1944, %v1946
    %v1948 = vrot.slane %v1941, %v1947
    %v1950 = vsub.f32 %v1854, %v1948
    %v1951 = vsel %vm1857, %v1849, 0.0
    %v1952 = vsel %vm1857, %v1851, 0.0
    %v1953 = vrot.slane %v1951, 4
    %v1954 = vadd.f32 %v1951, %v1953
    %v1955 = vrot.slane %v1954, 2
    %v1956 = vadd.f32 %v1954, %v1955
    %v1957 = vrot.slane %v1956, 1
    %v1958 = vadd.f32 %v1956, %v1957
    %v1959 = vrot.slane %v1952, 4
    %v1960 = vadd.f32 %v1952, %v1959
    %v1961 = vrot.slane %v1960, 2
    %v1962 = vadd.f32 %v1960, %v1961
    %v1963 = vrot.slane %v1962, 1
    %v1964 = vadd.f32 %v1962, %v1963
    %v1965 = vmul.f32 %v1958, 0.5
    %v1966 = vmul.f32 %v1964, 0.5
    %v1967 = vmul.f32 %v1951, %v1951
    %v1968 = vmul.f32 %v1952, %v1952
    %v1969 = vrot.slane %v1967, 4
    %v1970 = vadd.f32 %v1967, %v1969
    %v1971 = vrot.slane %v1970, 2
    %v1972 = vadd.f32 %v1970, %v1971
    %v1973 = vrot.slane %v1972, 1
    %v1974 = vadd.f32 %v1972, %v1973
    %v1975 = vrot.slane %v1968, 4
    %v1976 = vadd.f32 %v1968, %v1975
    %v1977 = vrot.slane %v1976, 2
    %v1978 = vadd.f32 %v1976, %v1977
    %v1979 = vrot.slane %v1978, 1
    %v1980 = vadd.f32 %v1978, %v1979
    %v1981 = vmul.f32 %v1974, 0.5
    %v1982 = vmul.f32 %v1980, 0.5
    %v1983 = vmul.f32 %v1965, %v1965
    %v1984 = vmul.f32 %v1966, %v1966
    %v1985 = vsub.f32 %v1981, %v1983
    %v1986 = vsub.f32 %v1982, %v1984
    %v1987 = vmax.f32 %v1985, 0.0
    %v1988 = vmax.f32 %v1986, 0.0
    %v1989 = vadd.f32 %v1987, 1e-05
    %v1990 = vadd.f32 %v1988, 1e-05
    %v1991 = vrsqrt.pop %v1989
    %v1992 = vrsqrt.pop %v1990
    %v1995 = vcombine.low %v1991, %v1992
    %v1997 = vunpack.c.l.s4 1966171168
    %v1998 = vunpack.c.0.s8 %v1997
    %v1999 = vlaneseq
    %v2000 = vshrl.u32 %v1999, 7
    %v2001 = vsub.s32 %v1998, %v2000
    %v2002 = vrot.slane %v1995, %v2001
    %v2004 = vunpack.c.l.s4 1966171168
    %v2005 = vunpack.c.0.s8 %v2004
    %v2006 = vlaneseq
    %v2007 = vshrl.u32 %v2006, 7
    %v2008 = vsub.s32 %v2005, %v2007
    %v2009 = vrot.slane %v2002, %v2008
    %v2011 = vmul.f32 %v1853, %v2009
    %v2013 = vlaneseq
    %v2014 = vshrl.u32 %v2013, 7
    %v2015 = vsub.s32 0, %v2014
    %v2016 = vrot.slane %v2011, %v2015
    %v2017 = vlaneseq
    %v2018 = vshrl.u32 %v2017, 7
    %v2019 = vsub.s32 1, %v2018
    %v2020 = vrot.slane %v2011, %v2019
    %v2023 = vmul.f32 %v1965, %v2016
    %v2024 = vmul.f32 %v1966, %v2020
    %v2027 = vcombine.low %v2023, %v2024
    %v2029 = vunpack.c.l.s4 1966171168
    %v2030 = vunpack.c.0.s8 %v2029
    %v2031 = vlaneseq
    %v2032 = vshrl.u32 %v2031, 7
    %v2033 = vsub.s32 %v2030, %v2032
    %v2034 = vrot.slane %v2027, %v2033
    %v2036 = vunpack.c.l.s4 1966171168
    %v2037 = vunpack.c.0.s8 %v2036
    %v2038 = vlaneseq
    %v2039 = vshrl.u32 %v2038, 7
    %v2040 = vsub.s32 %v2037, %v2039
    %v2041 = vrot.slane %v2034, %v2040
    %v2043 = vsub.f32 %v1854, %v2041
    %v2044 = vadd.s32 %v1856, 8
    %vm2045 = vcmp.lt.s32.totalorder %v1856, 8
    %vm2046 = vcmp.lt.s32.totalorder %v2044, 8
    %v2047 = vsel %vm2045, %v1923, %v2016
    %v2048 = vsel %vm2045, %v1927, %v2020
    %v2049 = vsel %vm2046, %v1923, %v2016
    %v2050 = vsel %vm2046, %v1927, %v2020
    %v2052 = vlaneseq
    %v2053 = vshrl.u32 %v2052, 7
    %v2054 = vsub.s32 0, %v2053
    %v2055 = vrot.slane %v1950, %v2054
    %v2056 = vlaneseq
    %v2057 = vshrl.u32 %v2056, 7
    %v2058 = vsub.s32 1, %v2057
    %v2059 = vrot.slane %v1950, %v2058
    %v2063 = vlaneseq
    %v2064 = vshrl.u32 %v2063, 7
    %v2065 = vsub.s32 0, %v2064
    %v2066 = vrot.slane %v2043, %v2065
    %v2067 = vlaneseq
    %v2068 = vshrl.u32 %v2067, 7
    %v2069 = vsub.s32 1, %v2068
    %v2070 = vrot.slane %v2043, %v2069
    %v2073 = vsel %vm2045, %v2055, %v2066
    %v2074 = vsel %vm2045, %v2059, %v2070
    %v2075 = vsel %vm2046, %v2055, %v2066
    %v2076 = vsel %vm2046, %v2059, %v2070
    %v2077 = vmul.f32 %v1845, %v2047
    %v2078 = vmul.f32 %v1847, %v2048
    %v2079 = vmul.f32 %v1849, %v2049
    %v2080 = vmul.f32 %v1851, %v2050
    %v2081 = vadd.f32 %v2077, %v2073
    %v2082 = vadd.f32 %v2078, %v2074
    %v2083 = vadd.f32 %v2079, %v2075
    %v2084 = vadd.f32 %v2080, %v2076
    %v2085 = vmax.f32 %v2081, 0.0
    %v2086 = vmax.f32 %v2082, 0.0
    %v2087 = vmax.f32 %v2083, 0.0
    %v2088 = vmax.f32 %v2084, 0.0
    %v2089 = vpack.c.bf16 %v2087, %v2085
    %v2090 = vpack.c.bf16 %v2088, %v2086
    %v2091 = vld [vmem:[%s10] sm:$0xf]
    %v2092 = vld [vmem:[%s10 + $0x4] sm:$0xf]
    %v2093 = vld [vmem:[%s10 + $0x8] sm:$0xf]
    %v2094 = vld [vmem:[%s10 + $0xc] sm:$0xf]
    %v2095 = vld [vmem:[%s10 + $0x10] sm:$0xf]
    %v2096 = vld [vmem:[%s10 + $0x14] sm:$0xf]
    %v2097 = vld [vmem:[%s10 + $0x18] sm:$0xf]
    %v2098 = vld [vmem:[%s10 + $0x1c] sm:$0xf]
    %v2099 = vld [vmem:[%s10 + $0x20] sm:$0xf]
    %v2100 = vld [vmem:[%s10 + $0x24] sm:$0xf]
    %v2101 = vld [vmem:[%s10 + $0x28] sm:$0xf]
    %v2102 = vld [vmem:[%s10 + $0x2c] sm:$0xf]
    %v2103 = vld [vmem:[%s10 + $0x30] sm:$0xf]
    %v2104 = vld [vmem:[%s10 + $0x34] sm:$0xf]
    %v2105 = vld [vmem:[%s10 + $0x38] sm:$0xf]
    %v2106 = vld [vmem:[%s10 + $0x3c] sm:$0xf]
    %v2107 = vld [vmem:[%s10 + $0x40] sm:$0xf]
    %v2108 = vld [vmem:[%s10 + $0x44] sm:$0xf]
    %v2109 = vld [vmem:[%s10 + $0x48] sm:$0xf]
    %v2110 = vld [vmem:[%s10 + $0x4c] sm:$0xf]
    %v2111 = vld [vmem:[%s10 + $0x50] sm:$0xf]
    %v2112 = vld [vmem:[%s10 + $0x54] sm:$0xf]
    %v2113 = vld [vmem:[%s10 + $0x58] sm:$0xf]
    %v2114 = vld [vmem:[%s10 + $0x5c] sm:$0xf]
    %v2115 = vld [vmem:[%s10 + $0x60] sm:$0xf]
    %v2116 = vld [vmem:[%s10 + $0x64] sm:$0xf]
    %v2117 = vld [vmem:[%s10 + $0x68] sm:$0xf]
    %v2118 = vld [vmem:[%s10 + $0x6c] sm:$0xf]
    %v2119 = vld [vmem:[%s10 + $0x70] sm:$0xf]
    %v2120 = vld [vmem:[%s10 + $0x74] sm:$0xf]
    %v2121 = vld [vmem:[%s10 + $0x78] sm:$0xf]
    %v2122 = vld [vmem:[%s10 + $0x7c] sm:$0xf]
    %v2123 = vld [vmem:[%s11] sm:$0x1]
    %v2125 = vlaneseq
    %v2126 = vshrl.u32 %v2125, 7
    %v2127 = vsub.s32 0, %v2126
    %v2128 = vrot.slane %v2123, %v2127
    %v2162 = vunpack.c.l.b16 %v2091
    %v2163 = vunpack.c.l.b16 %v2092
    %v2164 = vunpack.c.l.b16 %v2093
    %v2165 = vunpack.c.l.b16 %v2094
    %v2166 = vunpack.c.l.b16 %v2095
    %v2167 = vunpack.c.l.b16 %v2096
    %v2168 = vunpack.c.l.b16 %v2097
    %v2169 = vunpack.c.l.b16 %v2098
    %v2170 = vunpack.c.l.b16 %v2099
    %v2171 = vunpack.c.l.b16 %v2100
    %v2172 = vunpack.c.l.b16 %v2101
    %v2173 = vunpack.c.l.b16 %v2102
    %v2174 = vunpack.c.l.b16 %v2103
    %v2175 = vunpack.c.l.b16 %v2104
    %v2176 = vunpack.c.l.b16 %v2105
    %v2177 = vunpack.c.l.b16 %v2106
    %v2178 = vunpack.c.l.b16 %v2107
    %v2179 = vunpack.c.l.b16 %v2108
    %v2180 = vunpack.c.l.b16 %v2109
    %v2181 = vunpack.c.l.b16 %v2110
    %v2182 = vunpack.c.l.b16 %v2111
    %v2183 = vunpack.c.l.b16 %v2112
    %v2184 = vunpack.c.l.b16 %v2113
    %v2185 = vunpack.c.l.b16 %v2114
    %v2186 = vunpack.c.l.b16 %v2115
    %v2187 = vunpack.c.l.b16 %v2116
    %v2188 = vunpack.c.l.b16 %v2117
    %v2189 = vunpack.c.l.b16 %v2118
    %v2190 = vunpack.c.l.b16 %v2119
    %v2191 = vunpack.c.l.b16 %v2120
    %v2192 = vunpack.c.l.b16 %v2121
    %v2193 = vunpack.c.l.b16 %v2122
    %v2194 = vpack.c.b16 %v2163, %v2162
    %v2195 = vpack.c.b16 %v2165, %v2164
    %v2196 = vpack.c.b16 %v2167, %v2166
    %v2197 = vpack.c.b16 %v2169, %v2168
    %v2198 = vpack.c.b16 %v2171, %v2170
    %v2199 = vpack.c.b16 %v2173, %v2172
    %v2200 = vpack.c.b16 %v2175, %v2174
    %v2201 = vpack.c.b16 %v2177, %v2176
    %v2202 = vpack.c.b16 %v2179, %v2178
    %v2203 = vpack.c.b16 %v2181, %v2180
    %v2204 = vpack.c.b16 %v2183, %v2182
    %v2205 = vpack.c.b16 %v2185, %v2184
    %v2206 = vpack.c.b16 %v2187, %v2186
    %v2207 = vpack.c.b16 %v2189, %v2188
    %v2208 = vpack.c.b16 %v2191, %v2190
    %v2209 = vpack.c.b16 %v2193, %v2192
    %2226 = vmatprep.subr.bf16.mxu0 0
    %2227 = vmatpush1.bf16.msra.mxu0 %v2194
    %2228 = vmatprep.subr.bf16.mxu0 0
    %2229 = vmatpush1.bf16.msra.mxu0 %v2195
    %2230 = vmatprep.subr.bf16.mxu0 0
    %2231 = vmatpush1.bf16.msra.mxu0 %v2196
    %2232 = vmatprep.subr.bf16.mxu0 0
    %2233 = vmatpush1.bf16.msra.mxu0 %v2197
    %2234 = vmatprep.subr.bf16.mxu0 0
    %2235 = vmatpush1.bf16.msra.mxu0 %v2198
    %2236 = vmatprep.subr.bf16.mxu0 0
    %2237 = vmatpush1.bf16.msra.mxu0 %v2199
    %2238 = vmatprep.subr.bf16.mxu0 0
    %2239 = vmatpush1.bf16.msra.mxu0 %v2200
    %2240 = vmatprep.subr.bf16.mxu0 0
    %2241 = vmatpush1.bf16.msra.mxu0 %v2201
    %2242 = vmatprep.subr.bf16.mxu0 0
    %2243 = vmatpush1.bf16.msra.mxu0 %v2202
    %2244 = vmatprep.subr.bf16.mxu0 0
    %2245 = vmatpush1.bf16.msra.mxu0 %v2203
    %2246 = vmatprep.subr.bf16.mxu0 0
    %2247 = vmatpush1.bf16.msra.mxu0 %v2204
    %2248 = vmatprep.subr.bf16.mxu0 0
    %2249 = vmatpush1.bf16.msra.mxu0 %v2205
    %2250 = vmatprep.subr.bf16.mxu0 0
    %2251 = vmatpush1.bf16.msra.mxu0 %v2206
    %2252 = vmatprep.subr.bf16.mxu0 0
    %2253 = vmatpush1.bf16.msra.mxu0 %v2207
    %2254 = vmatprep.subr.bf16.mxu0 0
    %2255 = vmatpush1.bf16.msra.mxu0 %v2208
    %2256 = vmatprep.subr.bf16.mxu0 0
    %2257 = vmatpush1.bf16.msra.mxu0 %v2209
    %2258 = vmatprep.mubr.bf16.mxu0 %v2090
    %2259 = vmatmul.mubr.bf16.gmra.mrb[0].mxu0 %v2089
    %v2260 = vpop.f32.mrb[0].mxu0
    %v2261 = vadd.f32 %v2128, %v2260
    %v2262 = vpop.f32.mrb[0].mxu0
    %v2263 = vpop.f32.mrb[0].mxu0
    %v2264 = vadd.f32 %v2128, %v2263
    %v2265 = vpop.f32.mrb[0].mxu0
    %2266 = vdwg.mxu0
    %2267 = vst [vmem:[%s12] sm:$0xff] %v2261
    %2268 = vst [vmem:[%s12 + $0x8] sm:$0xff] %v2264
    // Predicated region
    $region70: #{simsiam_forward.1} parent=1 // pred_check
      _
    $region71: #{simsiam_forward.1} parent=1 // pred_check_branch
      %2270 = sbr.rel (0) target = $region73
    $region72: #{simsiam_forward.1} parent=1 // pred_region
      _
    $region73: #{simsiam_forward.1} parent=1 // pred_fallthru
      _
    // Predicated region
    $region74: #{simsiam_forward.1} parent=1 // pred_check
      _
    $region75: #{simsiam_forward.1} parent=1 // pred_check_branch
      %2272 = sbr.rel (0) target = $region77
    $region76: #{simsiam_forward.1} parent=1 // pred_region
      _
    $region77: #{simsiam_forward.1} parent=1 // pred_fallthru
      _
    // Predicated region
    $region78: #{simsiam_forward.1} parent=1 // pred_check
      _
    $region79: #{simsiam_forward.1} parent=1 // pred_check_branch
      %2274 = sbr.rel (0) target = $region81
    $region80: #{simsiam_forward.1} parent=1 // pred_region
      _
    $region81: #{simsiam_forward.1} parent=1 // pred_fallthru
      _
    // Predicated region
    $region82: #{simsiam_forward.1} parent=1 // pred_check
      _
    $region83: #{simsiam_forward.1} parent=1 // pred_check_branch
      %2276 = sbr.rel (0) target = $region85
    $region84: #{simsiam_forward.1} parent=1 // pred_region
      _
    $region85: #{simsiam_forward.1} parent=1 // pred_fallthru
      _
    %2277 = vsyncpa [#allocation3], 1
    %2278 = vsyncpa [#allocation5], 1
    %2279 = vsyncpa [#allocation8], 1

</llo_original>
